<compile_context>
chip_gen: v7x
topology: tpu7x:2x2x1
jax: 0.10.0
libtpu: 0.0.40
codegen_flags: <defaults>
</compile_context>

<pallas_src>
import functools

import jax
import jax.numpy as jnp
from jax import lax
from jax.experimental import pallas as pl
from jax.experimental.pallas import tpu as pltpu

EPS = 1e-5  # NewBatchNorm1D eps


# --------------------------------------------------------------------------
# Recurrent Pallas kernel: TT timesteps of  h @ W_h + BN_h + gating + BN_c
# per grid step.  h/c carried in VMEM scratch across grid steps.
# --------------------------------------------------------------------------
def lstm_recurrent_kernel(pre_ref, h0_ref, c0_ref, wh_ref,
                          bnh_w_ref, bnh_b_ref, bnc_w_ref, bnc_b_ref,
                          out_ref, hn_ref, cn_ref,
                          h_scr, c_scr, *, hidden_size, time_tile):
    s = pl.program_id(0)

    @pl.when(s == 0)
    def _():
        h_scr[...] = h0_ref[...]
        c_scr[...] = c0_ref[...]

    H = hidden_size
    w_hid = wh_ref[...]            # (H, 4H), resident in VMEM across all steps
    bnh_w = bnh_w_ref[...]         # (1, 4H)
    bnh_b = bnh_b_ref[...]         # (1, 4H)
    bnc_w = bnc_w_ref[...]         # (1, H)
    bnc_b = bnc_b_ref[...]         # (1, H)

    def step(tt, carry):
        h, c = carry
        # recurrent projection on the MXU
        wh = jnp.dot(h, w_hid, preferred_element_type=jnp.float32)   # (B, 4H)

        # BN_h (training, measure='SD'): batch stats + fused scale (EUP recip)
        m = jnp.mean(wh, axis=0, keepdims=True)
        std = jnp.sqrt(jnp.mean((wh - m) ** 2, axis=0, keepdims=True))
        scale = bnh_w * pl.reciprocal(std + EPS, approx=True)
        # pre_ref already contains BN_i(x_t @ W_i) + bias (hoisted in wrapper)
        gates = (wh - m) * scale + bnh_b + pre_ref[tt]                # (B, 4H)

        # one full-width (128-lane) sigmoid, slice afterwards.
        # NOTE: for H < 128 the gate slices sit at lane offsets 32/64/96; for
        # H a multiple of 128 they become lane-aligned automatically.
        sig = jax.nn.sigmoid(gates)
        f = sig[:, 0:H]
        i = sig[:, H:2 * H]
        o = sig[:, 2 * H:3 * H]
        g = jnp.tanh(gates[:, 3 * H:4 * H])

        c1 = f * c + i * g

        # BN_c on the new cell state
        mc = jnp.mean(c1, axis=0, keepdims=True)
        stdc = jnp.sqrt(jnp.mean((c1 - mc) ** 2, axis=0, keepdims=True))
        scalec = bnc_w * pl.reciprocal(stdc + EPS, approx=True)
        h1 = o * jnp.tanh((c1 - mc) * scalec + bnc_b)

        out_ref[tt] = h1
        return h1, c1

    h, c = lax.fori_loop(0, time_tile, step,
                         (h_scr[...], c_scr[...]), unroll=True)
    h_scr[...] = h
    c_scr[...] = c

    # final states written exactly once, on the last grid step
    @pl.when(s == pl.num_programs(0) - 1)
    def _():
        hn_ref[...] = h
        cn_ref[...] = c

    # TODO(synk): running_mean / running_var momentum updates of the three
    # NewBatchNorm1D buffers are stateful side-effects that do not influence
    # the training-mode forward output; they are not materialized here.


# --------------------------------------------------------------------------
# One LSTMCell layer over the full sequence.
# --------------------------------------------------------------------------
def lstm_layer_pallas(x, h0, c0, params, *, time_tile=8):
    T, B, Din = x.shape
    H = h0.shape[1]
    (wi, wh, bias, bnh_w, bnh_b, bni_w, bni_b, bnc_w, bnc_b) = params

    # ---- hoisted, h-independent input path (review item 1) ----------------
    # one big (T*B, Din) @ (Din, 4H) matmul, then BN_i with per-timestep batch
    # statistics; the LSTM bias is folded into BN_i's bias (review item 5).
    wx = (x.reshape(T * B, Din) @ wi).reshape(T, B, 4 * H)
    mean = jnp.mean(wx, axis=1, keepdims=True)
    std = jnp.sqrt(jnp.mean((wx - mean) ** 2, axis=1, keepdims=True))
    pre = (bni_w * (wx - mean) / (std + EPS) + (bni_b + bias)).astype(jnp.float32)

    assert T % time_tile == 0, "pad T to a multiple of time_tile"
    TT = time_tile
    grid = (T // TT,)

    def const2d(shape):
        # invariant inputs: resident across the whole grid.
        return pl.BlockSpec(shape, lambda s: (0, 0))

    kernel = functools.partial(lstm_recurrent_kernel,
                               hidden_size=H, time_tile=TT)

    out, hn, cn = pl.pallas_call(
        kernel,
        grid=grid,
        in_specs=[
            pl.BlockSpec((TT, B, 4 * H), lambda s: (s, 0, 0)),  # pre-activations
            const2d((B, H)),                                    # h0
            const2d((B, H)),                                    # c0
            const2d((H, 4 * H)),                                # weight_hidden
            const2d((1, 4 * H)), const2d((1, 4 * H)),           # BN_h w, b
            const2d((1, H)), const2d((1, H)),                   # BN_c w, b
        ],
        out_specs=(
            pl.BlockSpec((TT, B, H), lambda s: (s, 0, 0)),      # stacked h_t
            const2d((B, H)),                                    # h_n
            const2d((B, H)),                                    # c_n
        ),
        out_shape=(
            jax.ShapeDtypeStruct((T, B, H), jnp.float32),
            jax.ShapeDtypeStruct((B, H), jnp.float32),
            jax.ShapeDtypeStruct((B, H), jnp.float32),
        ),
        scratch_shapes=[
            pltpu.VMEM((B, H), jnp.float32),   # h carry
            pltpu.VMEM((B, H), jnp.float32),   # c carry
        ],
        compiler_params=pltpu.CompilerParams(
            dimension_semantics=("arbitrary",)),
    )(pre, h0, c0, wh,
      bnh_w.reshape(1, 4 * H), bnh_b.reshape(1, 4 * H),
      bnc_w.reshape(1, H), bnc_b.reshape(1, H))
    return out, hn, cn


def lstm_forward_pallas(x, hx, layer_params, *, time_tile=8):
    """Equivalent of LSTM.forward: each layer re-uses the original hx
    (as the PyTorch code does); dropout=0 so dropout is identity."""
    h0, c0 = hx
    layer_output, hn, cn = None, None, None
    inp = x
    for params in layer_params:
        layer_output, hn, cn = lstm_layer_pallas(inp, h0, c0, params,
                                                 time_tile=time_tile)
        inp = layer_output            # dropout(p=0) == identity
    return layer_output, (hn, cn)


# ---------------- pure-JAX reference (for correctness check) ----------------
def _bn_sd_ref(v, w, b):
    mean = jnp.mean(v, axis=0, keepdims=True)
    std = jnp.sqrt(jnp.mean((v - mean) ** 2, axis=0, keepdims=True))
    return w * (v - mean) / (std + EPS) + b


def lstm_forward_ref(x, hx, layer_params):
    h0, c0 = hx
    inp = x
    last = None
    for params in layer_params:
        (wi, wh_, bias, bnh_w, bnh_b, bni_w, bni_b, bnc_w, bnc_b) = params
        h, c = h0, c0
        outs = []
        for t in range(inp.shape[0]):
            wh = h @ wh_
            wx = inp[t] @ wi
            wh = _bn_sd_ref(wh, bnh_w, bnh_b)
            wx = _bn_sd_ref(wx, bni_w, bni_b)
            gates = wh + wx + bias
            f, i, o, g = jnp.split(gates, 4, axis=1)
            c = jax.nn.sigmoid(f) * c + jax.nn.sigmoid(i) * jnp.tanh(g)
            h = jax.nn.sigmoid(o) * jnp.tanh(_bn_sd_ref(c, bnc_w, bnc_b))
            outs.append(h)
        inp = jnp.stack(outs, 0)
        last = (h, c)
    return inp, last


# ---------------- deterministic parameter construction ----------------------
def make_layer_params(key, layer_input_size, hidden_size):
    H = hidden_size
    ks = jax.random.split(key, 5)
    # weight_input (Din, 4H), weight_hidden (H, 4H): synthetic stand-in for
    # orthogonal init; bias (4H,) = 0 (matches reset_parameters).
    wi = 0.1 * jax.random.normal(ks[0], (layer_input_size, 4 * H), jnp.float32)
    wh = 0.1 * jax.random.normal(ks[1], (H, 4 * H), jnp.float32)
    bias = jnp.zeros((4 * H,), jnp.float32)
    # NewBatchNorm1D weights: 0.02*randn + 0.1 ; biases: 0 (as in LSTMCell.__init__)
    bnh_w = 0.02 * jax.random.normal(ks[2], (4 * H,), jnp.float32) + 0.1
    bni_w = 0.02 * jax.random.normal(ks[3], (4 * H,), jnp.float32) + 0.1
    bnc_w = 0.02 * jax.random.normal(ks[4], (H,), jnp.float32) + 0.1
    bnh_b = jnp.zeros((4 * H,), jnp.float32)
    bni_b = jnp.zeros((4 * H,), jnp.float32)
    bnc_b = jnp.zeros((H,), jnp.float32)
    return (wi, wh, bias, bnh_w, bnh_b, bni_w, bni_b, bnc_w, bnc_b)


if __name__ == "__main__":
    T, B = 8, 8
    INPUT_SIZE, HIDDEN_SIZE, NUM_LAYERS = 16, 32, 2
    TIME_TILE = 4          # grid of 2 steps, 4 unrolled timesteps each

    root = jax.random.PRNGKey(0)
    kx, kh, kc, kp = jax.random.split(root, 4)

    x = jax.random.normal(kx, (T, B, INPUT_SIZE), jnp.float32)
    h0 = jax.random.normal(kh, (B, HIDDEN_SIZE), jnp.float32)
    c0 = jax.random.normal(kc, (B, HIDDEN_SIZE), jnp.float32)

    layer_params = []
    pkeys = jax.random.split(kp, NUM_LAYERS)
    for layer in range(NUM_LAYERS):
        din = INPUT_SIZE if layer == 0 else HIDDEN_SIZE
        layer_params.append(make_layer_params(pkeys[layer], din, HIDDEN_SIZE))

    out, (h_n, c_n) = lstm_forward_pallas(x, (h0, c0), layer_params,
                                          time_tile=TIME_TILE)
    jax.block_until_ready((out, h_n, c_n))

    ref_out, (ref_h, ref_c) = lstm_forward_ref(x, (h0, c0), layer_params)
    # Tolerance loosened from 1e-4: BN_h / BN_c inside the kernel use the EUP
    # approximate reciprocal (pl.reciprocal(approx=True)) per the perf review.
    assert jnp.allclose(out, ref_out, rtol=5e-3, atol=5e-3)
    assert jnp.allclose(h_n, ref_h, rtol=5e-3, atol=5e-3)
    assert jnp.allclose(c_n, ref_c, rtol=5e-3, atol=5e-3)

    print("KERNEL_OK")
</pallas_src>

<mosaic_0001>
module attributes {stable_mosaic.version = 11 : i64} {
  func.func @lstm_recurrent_kernel(%arg0: i32, %arg1: memref<4x8x128xf32, #tpu.memory_space<vmem>>, %arg2: memref<8x32xf32, #tpu.memory_space<vmem>>, %arg3: memref<8x32xf32, #tpu.memory_space<vmem>>, %arg4: memref<32x128xf32, #tpu.memory_space<vmem>>, %arg5: memref<1x128xf32, #tpu.memory_space<vmem>>, %arg6: memref<1x128xf32, #tpu.memory_space<vmem>>, %arg7: memref<1x32xf32, #tpu.memory_space<vmem>>, %arg8: memref<1x32xf32, #tpu.memory_space<vmem>>, %arg9: memref<4x8x32xf32, #tpu.memory_space<vmem>>, %arg10: memref<8x32xf32, #tpu.memory_space<vmem>>, %arg11: memref<8x32xf32, #tpu.memory_space<vmem>>, %arg12: memref<8x32xf32, #tpu.memory_space<vmem>>, %arg13: memref<8x32xf32, #tpu.memory_space<vmem>>) attributes {dimension_semantics = [#tpu.dimension_semantics<arbitrary>], iteration_bounds = array<i64: 2>, scalar_prefetch = 0 : i64, scratch_operands = 2 : i64, tpu.core_type = #tpu.core_type<tc>, window_params = [{transform_indices = @transform_0, window_bounds = array<i64: 4, 8, 128>}, {pipeline_mode = #tpu.pipeline_mode<synchronous>, transform_indices = @transform_1, window_bounds = array<i64: 8, 32>}, {pipeline_mode = #tpu.pipeline_mode<synchronous>, transform_indices = @transform_2, window_bounds = array<i64: 8, 32>}, {pipeline_mode = #tpu.pipeline_mode<synchronous>, transform_indices = @transform_3, window_bounds = array<i64: 32, 128>}, {pipeline_mode = #tpu.pipeline_mode<synchronous>, transform_indices = @transform_4, window_bounds = array<i64: 1, 128>}, {pipeline_mode = #tpu.pipeline_mode<synchronous>, transform_indices = @transform_5, window_bounds = array<i64: 1, 128>}, {pipeline_mode = #tpu.pipeline_mode<synchronous>, transform_indices = @transform_6, window_bounds = array<i64: 1, 32>}, {pipeline_mode = #tpu.pipeline_mode<synchronous>, transform_indices = @transform_7, window_bounds = array<i64: 1, 32>}, {transform_indices = @transform_8, window_bounds = array<i64: 4, 8, 32>}, {pipeline_mode = #tpu.pipeline_mode<synchronous>, transform_indices = @transform_9, window_bounds = array<i64: 8, 32>}, {pipeline_mode = #tpu.pipeline_mode<synchronous>, transform_indices = @transform_10, window_bounds = array<i64: 8, 32>}]} {
    %c0_i32 = arith.constant 0 : i32
    %0 = arith.cmpi eq, %arg0, %c0_i32 : i32
    %1 = arith.extui %0 : i1 to i32
    %c0_i32_0 = arith.constant 0 : i32
    %2 = arith.cmpi ne, %1, %c0_i32_0 : i32
    scf.if %2 {
      %c0_84 = arith.constant 0 : index
      %c0_85 = arith.constant 0 : index
      %287 = vector.load %arg2[%c0_84, %c0_85] : memref<8x32xf32, #tpu.memory_space<vmem>>, vector<8x32xf32>
      %c0_86 = arith.constant 0 : index
      %c0_87 = arith.constant 0 : index
      %288 = vector.load %arg12[%c0_86, %c0_87] : memref<8x32xf32, #tpu.memory_space<vmem>>, vector<8x32xf32>
      tpu.vector_store %arg12[%c0_86, %c0_87], %287 {strides = array<i32>} : memref<8x32xf32, #tpu.memory_space<vmem>>, vector<8x32xf32>,
      %c0_88 = arith.constant 0 : index
      %c0_89 = arith.constant 0 : index
      %289 = vector.load %arg3[%c0_88, %c0_89] : memref<8x32xf32, #tpu.memory_space<vmem>>, vector<8x32xf32>
      %c0_90 = arith.constant 0 : index
      %c0_91 = arith.constant 0 : index
      %290 = vector.load %arg13[%c0_90, %c0_91] : memref<8x32xf32, #tpu.memory_space<vmem>>, vector<8x32xf32>
      tpu.vector_store %arg13[%c0_90, %c0_91], %289 {strides = array<i32>} : memref<8x32xf32, #tpu.memory_space<vmem>>, vector<8x32xf32>,
    } else {
    }
    %c0 = arith.constant 0 : index
    %c0_1 = arith.constant 0 : index
    %3 = vector.load %arg4[%c0, %c0_1] : memref<32x128xf32, #tpu.memory_space<vmem>>, vector<32x128xf32>
    %c0_2 = arith.constant 0 : index
    %c0_3 = arith.constant 0 : index
    %4 = vector.load %arg5[%c0_2, %c0_3] : memref<1x128xf32, #tpu.memory_space<vmem>>, vector<1x128xf32>
    %c0_4 = arith.constant 0 : index
    %c0_5 = arith.constant 0 : index
    %5 = vector.load %arg6[%c0_4, %c0_5] : memref<1x128xf32, #tpu.memory_space<vmem>>, vector<1x128xf32>
    %c0_6 = arith.constant 0 : index
    %c0_7 = arith.constant 0 : index
    %6 = vector.load %arg7[%c0_6, %c0_7] : memref<1x32xf32, #tpu.memory_space<vmem>>, vector<1x32xf32>
    %c0_8 = arith.constant 0 : index
    %c0_9 = arith.constant 0 : index
    %7 = vector.load %arg8[%c0_8, %c0_9] : memref<1x32xf32, #tpu.memory_space<vmem>>, vector<1x32xf32>
    %c0_10 = arith.constant 0 : index
    %c0_11 = arith.constant 0 : index
    %8 = vector.load %arg12[%c0_10, %c0_11] : memref<8x32xf32, #tpu.memory_space<vmem>>, vector<8x32xf32>
    %c0_12 = arith.constant 0 : index
    %c0_13 = arith.constant 0 : index
    %9 = vector.load %arg13[%c0_12, %c0_13] : memref<8x32xf32, #tpu.memory_space<vmem>>, vector<8x32xf32>
    %c0_i32_14 = arith.constant 0 : i32
    %cst = arith.constant dense<0.000000e+00> : vector<8x128xf32>
    %10 = tpu.matmul %8, %3, %cst {dimension_numbers = #tpu.dot_dimension_numbers<[1], [0], [0], [1], [0, 0, 1, 1], [], []>} : vector<8x32xf32>, vector<32x128xf32>, vector<8x128xf32> -> vector<8x128xf32>
    %cst_15 = arith.constant dense<0.000000e+00> : vector<128xf32>
    %11 = vector.multi_reduction <add>, %10, %cst_15 [0] : vector<8x128xf32> to vector<128xf32>
    %12 = vector.shape_cast %11 : vector<128xf32> to vector<1x128xf32>
    %cst_16 = arith.constant 8.000000e+00 : f32
    %13 = vector.broadcast %cst_16 : f32 to vector<1x128xf32>
    %14 = arith.divf %12, %13 : vector<1x128xf32>
    %15 = vector.broadcast %14 : vector<1x128xf32> to vector<8x128xf32>
    %16 = arith.subf %10, %15 : vector<8x128xf32>
    %17 = arith.mulf %16, %16 : vector<8x128xf32>
    %cst_17 = arith.constant dense<0.000000e+00> : vector<128xf32>
    %18 = vector.multi_reduction <add>, %17, %cst_17 [0] : vector<8x128xf32> to vector<128xf32>
    %19 = vector.shape_cast %18 : vector<128xf32> to vector<1x128xf32>
    %cst_18 = arith.constant 8.000000e+00 : f32
    %20 = vector.broadcast %cst_18 : f32 to vector<1x128xf32>
    %21 = arith.divf %19, %20 : vector<1x128xf32>
    %22 = math.sqrt %21 : vector<1x128xf32>
    %cst_19 = arith.constant 9.99999974E-6 : f32
    %23 = vector.broadcast %cst_19 : f32 to vector<1x128xf32>
    %24 = arith.addf %22, %23 : vector<1x128xf32>
    %25 = tpu.reciprocal %24 {approx = true} : vector<1x128xf32> -> vector<1x128xf32>
    %26 = arith.mulf %4, %25 : vector<1x128xf32>
    %27 = vector.broadcast %14 : vector<1x128xf32> to vector<8x128xf32>
    %28 = arith.subf %10, %27 : vector<8x128xf32>
    %29 = vector.broadcast %26 : vector<1x128xf32> to vector<8x128xf32>
    %30 = arith.mulf %28, %29 : vector<8x128xf32>
    %31 = vector.broadcast %5 : vector<1x128xf32> to vector<8x128xf32>
    %32 = arith.addf %30, %31 : vector<8x128xf32>
    %33 = arith.index_cast %c0_i32_14 : i32 to index
    %c0_20 = arith.constant 0 : index
    %c0_21 = arith.constant 0 : index
    %34 = vector.load %arg1[%33, %c0_20, %c0_21] : memref<4x8x128xf32, #tpu.memory_space<vmem>>, vector<1x8x128xf32>
    %35 = vector.shape_cast %34 : vector<1x8x128xf32> to vector<8x128xf32>
    %36 = arith.addf %32, %35 : vector<8x128xf32>
    %37 = arith.negf %36 : vector<8x128xf32>
    %38 = math.exp %37 : vector<8x128xf32>
    %cst_22 = arith.constant 1.000000e+00 : f32
    %39 = vector.broadcast %cst_22 : f32 to vector<8x128xf32>
    %40 = arith.addf %39, %38 : vector<8x128xf32>
    %41 = arith.divf %39, %40 : vector<8x128xf32>
    %42 = vector.extract_strided_slice %41 {offsets = [0, 0], sizes = [8, 32], strides = [1, 1]} : vector<8x128xf32> to vector<8x32xf32>
    %43 = vector.extract_strided_slice %41 {offsets = [0, 32], sizes = [8, 32], strides = [1, 1]} : vector<8x128xf32> to vector<8x32xf32>
    %44 = vector.extract_strided_slice %41 {offsets = [0, 64], sizes = [8, 32], strides = [1, 1]} : vector<8x128xf32> to vector<8x32xf32>
    %45 = vector.extract_strided_slice %36 {offsets = [0, 96], sizes = [8, 32], strides = [1, 1]} : vector<8x128xf32> to vector<8x32xf32>
    %46 = math.tanh %45 : vector<8x32xf32>
    %47 = arith.mulf %42, %9 : vector<8x32xf32>
    %48 = arith.mulf %43, %46 : vector<8x32xf32>
    %49 = arith.addf %47, %48 : vector<8x32xf32>
    %cst_23 = arith.constant dense<0.000000e+00> : vector<32xf32>
    %50 = vector.multi_reduction <add>, %49, %cst_23 [0] : vector<8x32xf32> to vector<32xf32>
    %51 = vector.shape_cast %50 : vector<32xf32> to vector<1x32xf32>
    %cst_24 = arith.constant 8.000000e+00 : f32
    %52 = vector.broadcast %cst_24 : f32 to vector<1x32xf32>
    %53 = arith.divf %51, %52 : vector<1x32xf32>
    %54 = vector.broadcast %53 : vector<1x32xf32> to vector<8x32xf32>
    %55 = arith.subf %49, %54 : vector<8x32xf32>
    %56 = arith.mulf %55, %55 : vector<8x32xf32>
    %cst_25 = arith.constant dense<0.000000e+00> : vector<32xf32>
    %57 = vector.multi_reduction <add>, %56, %cst_25 [0] : vector<8x32xf32> to vector<32xf32>
    %58 = vector.shape_cast %57 : vector<32xf32> to vector<1x32xf32>
    %cst_26 = arith.constant 8.000000e+00 : f32
    %59 = vector.broadcast %cst_26 : f32 to vector<1x32xf32>
    %60 = arith.divf %58, %59 : vector<1x32xf32>
    %61 = math.sqrt %60 : vector<1x32xf32>
    %cst_27 = arith.constant 9.99999974E-6 : f32
    %62 = vector.broadcast %cst_27 : f32 to vector<1x32xf32>
    %63 = arith.addf %61, %62 : vector<1x32xf32>
    %64 = tpu.reciprocal %63 {approx = true} : vector<1x32xf32> -> vector<1x32xf32>
    %65 = arith.mulf %6, %64 : vector<1x32xf32>
    %66 = vector.broadcast %53 : vector<1x32xf32> to vector<8x32xf32>
    %67 = arith.subf %49, %66 : vector<8x32xf32>
    %68 = vector.broadcast %65 : vector<1x32xf32> to vector<8x32xf32>
    %69 = arith.mulf %67, %68 : vector<8x32xf32>
    %70 = vector.broadcast %7 : vector<1x32xf32> to vector<8x32xf32>
    %71 = arith.addf %69, %70 : vector<8x32xf32>
    %72 = math.tanh %71 : vector<8x32xf32>
    %73 = arith.mulf %44, %72 : vector<8x32xf32>
    %74 = arith.index_cast %c0_i32_14 : i32 to index
    %c0_28 = arith.constant 0 : index
    %c0_29 = arith.constant 0 : index
    %75 = vector.load %arg9[%74, %c0_28, %c0_29] : memref<4x8x32xf32, #tpu.memory_space<vmem>>, vector<1x8x32xf32>
    %76 = vector.shape_cast %75 : vector<1x8x32xf32> to vector<8x32xf32>
    %77 = vector.shape_cast %73 : vector<8x32xf32> to vector<1x8x32xf32>
    tpu.vector_store %arg9[%74, %c0_28, %c0_29], %77 {strides = array<i32>} : memref<4x8x32xf32, #tpu.memory_space<vmem>>, vector<1x8x32xf32>,
    %c1_i32 = arith.constant 1 : i32
    %cst_30 = arith.constant dense<0.000000e+00> : vector<8x128xf32>
    %78 = tpu.matmul %73, %3, %cst_30 {dimension_numbers = #tpu.dot_dimension_numbers<[1], [0], [0], [1], [0, 0, 1, 1], [], []>} : vector<8x32xf32>, vector<32x128xf32>, vector<8x128xf32> -> vector<8x128xf32>
    %cst_31 = arith.constant dense<0.000000e+00> : vector<128xf32>
    %79 = vector.multi_reduction <add>, %78, %cst_31 [0] : vector<8x128xf32> to vector<128xf32>
    %80 = vector.shape_cast %79 : vector<128xf32> to vector<1x128xf32>
    %cst_32 = arith.constant 8.000000e+00 : f32
    %81 = vector.broadcast %cst_32 : f32 to vector<1x128xf32>
    %82 = arith.divf %80, %81 : vector<1x128xf32>
    %83 = vector.broadcast %82 : vector<1x128xf32> to vector<8x128xf32>
    %84 = arith.subf %78, %83 : vector<8x128xf32>
    %85 = arith.mulf %84, %84 : vector<8x128xf32>
    %cst_33 = arith.constant dense<0.000000e+00> : vector<128xf32>
    %86 = vector.multi_reduction <add>, %85, %cst_33 [0] : vector<8x128xf32> to vector<128xf32>
    %87 = vector.shape_cast %86 : vector<128xf32> to vector<1x128xf32>
    %cst_34 = arith.constant 8.000000e+00 : f32
    %88 = vector.broadcast %cst_34 : f32 to vector<1x128xf32>
    %89 = arith.divf %87, %88 : vector<1x128xf32>
    %90 = math.sqrt %89 : vector<1x128xf32>
    %cst_35 = arith.constant 9.99999974E-6 : f32
    %91 = vector.broadcast %cst_35 : f32 to vector<1x128xf32>
    %92 = arith.addf %90, %91 : vector<1x128xf32>
    %93 = tpu.reciprocal %92 {approx = true} : vector<1x128xf32> -> vector<1x128xf32>
    %94 = arith.mulf %4, %93 : vector<1x128xf32>
    %95 = vector.broadcast %82 : vector<1x128xf32> to vector<8x128xf32>
    %96 = arith.subf %78, %95 : vector<8x128xf32>
    %97 = vector.broadcast %94 : vector<1x128xf32> to vector<8x128xf32>
    %98 = arith.mulf %96, %97 : vector<8x128xf32>
    %99 = vector.broadcast %5 : vector<1x128xf32> to vector<8x128xf32>
    %100 = arith.addf %98, %99 : vector<8x128xf32>
    %101 = arith.index_cast %c1_i32 : i32 to index
    %c0_36 = arith.constant 0 : index
    %c0_37 = arith.constant 0 : index
    %102 = vector.load %arg1[%101, %c0_36, %c0_37] : memref<4x8x128xf32, #tpu.memory_space<vmem>>, vector<1x8x128xf32>
    %103 = vector.shape_cast %102 : vector<1x8x128xf32> to vector<8x128xf32>
    %104 = arith.addf %100, %103 : vector<8x128xf32>
    %105 = arith.negf %104 : vector<8x128xf32>
    %106 = math.exp %105 : vector<8x128xf32>
    %cst_38 = arith.constant 1.000000e+00 : f32
    %107 = vector.broadcast %cst_38 : f32 to vector<8x128xf32>
    %108 = arith.addf %107, %106 : vector<8x128xf32>
    %109 = arith.divf %107, %108 : vector<8x128xf32>
    %110 = vector.extract_strided_slice %109 {offsets = [0, 0], sizes = [8, 32], strides = [1, 1]} : vector<8x128xf32> to vector<8x32xf32>
    %111 = vector.extract_strided_slice %109 {offsets = [0, 32], sizes = [8, 32], strides = [1, 1]} : vector<8x128xf32> to vector<8x32xf32>
    %112 = vector.extract_strided_slice %109 {offsets = [0, 64], sizes = [8, 32], strides = [1, 1]} : vector<8x128xf32> to vector<8x32xf32>
    %113 = vector.extract_strided_slice %104 {offsets = [0, 96], sizes = [8, 32], strides = [1, 1]} : vector<8x128xf32> to vector<8x32xf32>
    %114 = math.tanh %113 : vector<8x32xf32>
    %115 = arith.mulf %110, %49 : vector<8x32xf32>
    %116 = arith.mulf %111, %114 : vector<8x32xf32>
    %117 = arith.addf %115, %116 : vector<8x32xf32>
    %cst_39 = arith.constant dense<0.000000e+00> : vector<32xf32>
    %118 = vector.multi_reduction <add>, %117, %cst_39 [0] : vector<8x32xf32> to vector<32xf32>
    %119 = vector.shape_cast %118 : vector<32xf32> to vector<1x32xf32>
    %cst_40 = arith.constant 8.000000e+00 : f32
    %120 = vector.broadcast %cst_40 : f32 to vector<1x32xf32>
    %121 = arith.divf %119, %120 : vector<1x32xf32>
    %122 = vector.broadcast %121 : vector<1x32xf32> to vector<8x32xf32>
    %123 = arith.subf %117, %122 : vector<8x32xf32>
    %124 = arith.mulf %123, %123 : vector<8x32xf32>
    %cst_41 = arith.constant dense<0.000000e+00> : vector<32xf32>
    %125 = vector.multi_reduction <add>, %124, %cst_41 [0] : vector<8x32xf32> to vector<32xf32>
    %126 = vector.shape_cast %125 : vector<32xf32> to vector<1x32xf32>
    %cst_42 = arith.constant 8.000000e+00 : f32
    %127 = vector.broadcast %cst_42 : f32 to vector<1x32xf32>
    %128 = arith.divf %126, %127 : vector<1x32xf32>
    %129 = math.sqrt %128 : vector<1x32xf32>
    %cst_43 = arith.constant 9.99999974E-6 : f32
    %130 = vector.broadcast %cst_43 : f32 to vector<1x32xf32>
    %131 = arith.addf %129, %130 : vector<1x32xf32>
    %132 = tpu.reciprocal %131 {approx = true} : vector<1x32xf32> -> vector<1x32xf32>
    %133 = arith.mulf %6, %132 : vector<1x32xf32>
    %134 = vector.broadcast %121 : vector<1x32xf32> to vector<8x32xf32>
    %135 = arith.subf %117, %134 : vector<8x32xf32>
    %136 = vector.broadcast %133 : vector<1x32xf32> to vector<8x32xf32>
    %137 = arith.mulf %135, %136 : vector<8x32xf32>
    %138 = vector.broadcast %7 : vector<1x32xf32> to vector<8x32xf32>
    %139 = arith.addf %137, %138 : vector<8x32xf32>
    %140 = math.tanh %139 : vector<8x32xf32>
    %141 = arith.mulf %112, %140 : vector<8x32xf32>
    %142 = arith.index_cast %c1_i32 : i32 to index
    %c0_44 = arith.constant 0 : index
    %c0_45 = arith.constant 0 : index
    %143 = vector.load %arg9[%142, %c0_44, %c0_45] : memref<4x8x32xf32, #tpu.memory_space<vmem>>, vector<1x8x32xf32>
    %144 = vector.shape_cast %143 : vector<1x8x32xf32> to vector<8x32xf32>
    %145 = vector.shape_cast %141 : vector<8x32xf32> to vector<1x8x32xf32>
    tpu.vector_store %arg9[%142, %c0_44, %c0_45], %145 {strides = array<i32>} : memref<4x8x32xf32, #tpu.memory_space<vmem>>, vector<1x8x32xf32>,
    %c2_i32 = arith.constant 2 : i32
    %cst_46 = arith.constant dense<0.000000e+00> : vector<8x128xf32>
    %146 = tpu.matmul %141, %3, %cst_46 {dimension_numbers = #tpu.dot_dimension_numbers<[1], [0], [0], [1], [0, 0, 1, 1], [], []>} : vector<8x32xf32>, vector<32x128xf32>, vector<8x128xf32> -> vector<8x128xf32>
    %cst_47 = arith.constant dense<0.000000e+00> : vector<128xf32>
    %147 = vector.multi_reduction <add>, %146, %cst_47 [0] : vector<8x128xf32> to vector<128xf32>
    %148 = vector.shape_cast %147 : vector<128xf32> to vector<1x128xf32>
    %cst_48 = arith.constant 8.000000e+00 : f32
    %149 = vector.broadcast %cst_48 : f32 to vector<1x128xf32>
    %150 = arith.divf %148, %149 : vector<1x128xf32>
    %151 = vector.broadcast %150 : vector<1x128xf32> to vector<8x128xf32>
    %152 = arith.subf %146, %151 : vector<8x128xf32>
    %153 = arith.mulf %152, %152 : vector<8x128xf32>
    %cst_49 = arith.constant dense<0.000000e+00> : vector<128xf32>
    %154 = vector.multi_reduction <add>, %153, %cst_49 [0] : vector<8x128xf32> to vector<128xf32>
    %155 = vector.shape_cast %154 : vector<128xf32> to vector<1x128xf32>
    %cst_50 = arith.constant 8.000000e+00 : f32
    %156 = vector.broadcast %cst_50 : f32 to vector<1x128xf32>
    %157 = arith.divf %155, %156 : vector<1x128xf32>
    %158 = math.sqrt %157 : vector<1x128xf32>
    %cst_51 = arith.constant 9.99999974E-6 : f32
    %159 = vector.broadcast %cst_51 : f32 to vector<1x128xf32>
    %160 = arith.addf %158, %159 : vector<1x128xf32>
    %161 = tpu.reciprocal %160 {approx = true} : vector<1x128xf32> -> vector<1x128xf32>
    %162 = arith.mulf %4, %161 : vector<1x128xf32>
    %163 = vector.broadcast %150 : vector<1x128xf32> to vector<8x128xf32>
    %164 = arith.subf %146, %163 : vector<8x128xf32>
    %165 = vector.broadcast %162 : vector<1x128xf32> to vector<8x128xf32>
    %166 = arith.mulf %164, %165 : vector<8x128xf32>
    %167 = vector.broadcast %5 : vector<1x128xf32> to vector<8x128xf32>
    %168 = arith.addf %166, %167 : vector<8x128xf32>
    %169 = arith.index_cast %c2_i32 : i32 to index
    %c0_52 = arith.constant 0 : index
    %c0_53 = arith.constant 0 : index
    %170 = vector.load %arg1[%169, %c0_52, %c0_53] : memref<4x8x128xf32, #tpu.memory_space<vmem>>, vector<1x8x128xf32>
    %171 = vector.shape_cast %170 : vector<1x8x128xf32> to vector<8x128xf32>
    %172 = arith.addf %168, %171 : vector<8x128xf32>
    %173 = arith.negf %172 : vector<8x128xf32>
    %174 = math.exp %173 : vector<8x128xf32>
    %cst_54 = arith.constant 1.000000e+00 : f32
    %175 = vector.broadcast %cst_54 : f32 to vector<8x128xf32>
    %176 = arith.addf %175, %174 : vector<8x128xf32>
    %177 = arith.divf %175, %176 : vector<8x128xf32>
    %178 = vector.extract_strided_slice %177 {offsets = [0, 0], sizes = [8, 32], strides = [1, 1]} : vector<8x128xf32> to vector<8x32xf32>
    %179 = vector.extract_strided_slice %177 {offsets = [0, 32], sizes = [8, 32], strides = [1, 1]} : vector<8x128xf32> to vector<8x32xf32>
    %180 = vector.extract_strided_slice %177 {offsets = [0, 64], sizes = [8, 32], strides = [1, 1]} : vector<8x128xf32> to vector<8x32xf32>
    %181 = vector.extract_strided_slice %172 {offsets = [0, 96], sizes = [8, 32], strides = [1, 1]} : vector<8x128xf32> to vector<8x32xf32>
    %182 = math.tanh %181 : vector<8x32xf32>
    %183 = arith.mulf %178, %117 : vector<8x32xf32>
    %184 = arith.mulf %179, %182 : vector<8x32xf32>
    %185 = arith.addf %183, %184 : vector<8x32xf32>
    %cst_55 = arith.constant dense<0.000000e+00> : vector<32xf32>
    %186 = vector.multi_reduction <add>, %185, %cst_55 [0] : vector<8x32xf32> to vector<32xf32>
    %187 = vector.shape_cast %186 : vector<32xf32> to vector<1x32xf32>
    %cst_56 = arith.constant 8.000000e+00 : f32
    %188 = vector.broadcast %cst_56 : f32 to vector<1x32xf32>
    %189 = arith.divf %187, %188 : vector<1x32xf32>
    %190 = vector.broadcast %189 : vector<1x32xf32> to vector<8x32xf32>
    %191 = arith.subf %185, %190 : vector<8x32xf32>
    %192 = arith.mulf %191, %191 : vector<8x32xf32>
    %cst_57 = arith.constant dense<0.000000e+00> : vector<32xf32>
    %193 = vector.multi_reduction <add>, %192, %cst_57 [0] : vector<8x32xf32> to vector<32xf32>
    %194 = vector.shape_cast %193 : vector<32xf32> to vector<1x32xf32>
    %cst_58 = arith.constant 8.000000e+00 : f32
    %195 = vector.broadcast %cst_58 : f32 to vector<1x32xf32>
    %196 = arith.divf %194, %195 : vector<1x32xf32>
    %197 = math.sqrt %196 : vector<1x32xf32>
    %cst_59 = arith.constant 9.99999974E-6 : f32
    %198 = vector.broadcast %cst_59 : f32 to vector<1x32xf32>
    %199 = arith.addf %197, %198 : vector<1x32xf32>
    %200 = tpu.reciprocal %199 {approx = true} : vector<1x32xf32> -> vector<1x32xf32>
    %201 = arith.mulf %6, %200 : vector<1x32xf32>
    %202 = vector.broadcast %189 : vector<1x32xf32> to vector<8x32xf32>
    %203 = arith.subf %185, %202 : vector<8x32xf32>
    %204 = vector.broadcast %201 : vector<1x32xf32> to vector<8x32xf32>
    %205 = arith.mulf %203, %204 : vector<8x32xf32>
    %206 = vector.broadcast %7 : vector<1x32xf32> to vector<8x32xf32>
    %207 = arith.addf %205, %206 : vector<8x32xf32>
    %208 = math.tanh %207 : vector<8x32xf32>
    %209 = arith.mulf %180, %208 : vector<8x32xf32>
    %210 = arith.index_cast %c2_i32 : i32 to index
    %c0_60 = arith.constant 0 : index
    %c0_61 = arith.constant 0 : index
    %211 = vector.load %arg9[%210, %c0_60, %c0_61] : memref<4x8x32xf32, #tpu.memory_space<vmem>>, vector<1x8x32xf32>
    %212 = vector.shape_cast %211 : vector<1x8x32xf32> to vector<8x32xf32>
    %213 = vector.shape_cast %209 : vector<8x32xf32> to vector<1x8x32xf32>
    tpu.vector_store %arg9[%210, %c0_60, %c0_61], %213 {strides = array<i32>} : memref<4x8x32xf32, #tpu.memory_space<vmem>>, vector<1x8x32xf32>,
    %c3_i32 = arith.constant 3 : i32
    %cst_62 = arith.constant dense<0.000000e+00> : vector<8x128xf32>
    %214 = tpu.matmul %209, %3, %cst_62 {dimension_numbers = #tpu.dot_dimension_numbers<[1], [0], [0], [1], [0, 0, 1, 1], [], []>} : vector<8x32xf32>, vector<32x128xf32>, vector<8x128xf32> -> vector<8x128xf32>
    %cst_63 = arith.constant dense<0.000000e+00> : vector<128xf32>
    %215 = vector.multi_reduction <add>, %214, %cst_63 [0] : vector<8x128xf32> to vector<128xf32>
    %216 = vector.shape_cast %215 : vector<128xf32> to vector<1x128xf32>
    %cst_64 = arith.constant 8.000000e+00 : f32
    %217 = vector.broadcast %cst_64 : f32 to vector<1x128xf32>
    %218 = arith.divf %216, %217 : vector<1x128xf32>
    %219 = vector.broadcast %218 : vector<1x128xf32> to vector<8x128xf32>
    %220 = arith.subf %214, %219 : vector<8x128xf32>
    %221 = arith.mulf %220, %220 : vector<8x128xf32>
    %cst_65 = arith.constant dense<0.000000e+00> : vector<128xf32>
    %222 = vector.multi_reduction <add>, %221, %cst_65 [0] : vector<8x128xf32> to vector<128xf32>
    %223 = vector.shape_cast %222 : vector<128xf32> to vector<1x128xf32>
    %cst_66 = arith.constant 8.000000e+00 : f32
    %224 = vector.broadcast %cst_66 : f32 to vector<1x128xf32>
    %225 = arith.divf %223, %224 : vector<1x128xf32>
    %226 = math.sqrt %225 : vector<1x128xf32>
    %cst_67 = arith.constant 9.99999974E-6 : f32
    %227 = vector.broadcast %cst_67 : f32 to vector<1x128xf32>
    %228 = arith.addf %226, %227 : vector<1x128xf32>
    %229 = tpu.reciprocal %228 {approx = true} : vector<1x128xf32> -> vector<1x128xf32>
    %230 = arith.mulf %4, %229 : vector<1x128xf32>
    %231 = vector.broadcast %218 : vector<1x128xf32> to vector<8x128xf32>
    %232 = arith.subf %214, %231 : vector<8x128xf32>
    %233 = vector.broadcast %230 : vector<1x128xf32> to vector<8x128xf32>
    %234 = arith.mulf %232, %233 : vector<8x128xf32>
    %235 = vector.broadcast %5 : vector<1x128xf32> to vector<8x128xf32>
    %236 = arith.addf %234, %235 : vector<8x128xf32>
    %237 = arith.index_cast %c3_i32 : i32 to index
    %c0_68 = arith.constant 0 : index
    %c0_69 = arith.constant 0 : index
    %238 = vector.load %arg1[%237, %c0_68, %c0_69] : memref<4x8x128xf32, #tpu.memory_space<vmem>>, vector<1x8x128xf32>
    %239 = vector.shape_cast %238 : vector<1x8x128xf32> to vector<8x128xf32>
    %240 = arith.addf %236, %239 : vector<8x128xf32>
    %241 = arith.negf %240 : vector<8x128xf32>
    %242 = math.exp %241 : vector<8x128xf32>
    %cst_70 = arith.constant 1.000000e+00 : f32
    %243 = vector.broadcast %cst_70 : f32 to vector<8x128xf32>
    %244 = arith.addf %243, %242 : vector<8x128xf32>
    %245 = arith.divf %243, %244 : vector<8x128xf32>
    %246 = vector.extract_strided_slice %245 {offsets = [0, 0], sizes = [8, 32], strides = [1, 1]} : vector<8x128xf32> to vector<8x32xf32>
    %247 = vector.extract_strided_slice %245 {offsets = [0, 32], sizes = [8, 32], strides = [1, 1]} : vector<8x128xf32> to vector<8x32xf32>
    %248 = vector.extract_strided_slice %245 {offsets = [0, 64], sizes = [8, 32], strides = [1, 1]} : vector<8x128xf32> to vector<8x32xf32>
    %249 = vector.extract_strided_slice %240 {offsets = [0, 96], sizes = [8, 32], strides = [1, 1]} : vector<8x128xf32> to vector<8x32xf32>
    %250 = math.tanh %249 : vector<8x32xf32>
    %251 = arith.mulf %246, %185 : vector<8x32xf32>
    %252 = arith.mulf %247, %250 : vector<8x32xf32>
    %253 = arith.addf %251, %252 : vector<8x32xf32>
    %cst_71 = arith.constant dense<0.000000e+00> : vector<32xf32>
    %254 = vector.multi_reduction <add>, %253, %cst_71 [0] : vector<8x32xf32> to vector<32xf32>
    %255 = vector.shape_cast %254 : vector<32xf32> to vector<1x32xf32>
    %cst_72 = arith.constant 8.000000e+00 : f32
    %256 = vector.broadcast %cst_72 : f32 to vector<1x32xf32>
    %257 = arith.divf %255, %256 : vector<1x32xf32>
    %258 = vector.broadcast %257 : vector<1x32xf32> to vector<8x32xf32>
    %259 = arith.subf %253, %258 : vector<8x32xf32>
    %260 = arith.mulf %259, %259 : vector<8x32xf32>
    %cst_73 = arith.constant dense<0.000000e+00> : vector<32xf32>
    %261 = vector.multi_reduction <add>, %260, %cst_73 [0] : vector<8x32xf32> to vector<32xf32>
    %262 = vector.shape_cast %261 : vector<32xf32> to vector<1x32xf32>
    %cst_74 = arith.constant 8.000000e+00 : f32
    %263 = vector.broadcast %cst_74 : f32 to vector<1x32xf32>
    %264 = arith.divf %262, %263 : vector<1x32xf32>
    %265 = math.sqrt %264 : vector<1x32xf32>
    %cst_75 = arith.constant 9.99999974E-6 : f32
    %266 = vector.broadcast %cst_75 : f32 to vector<1x32xf32>
    %267 = arith.addf %265, %266 : vector<1x32xf32>
    %268 = tpu.reciprocal %267 {approx = true} : vector<1x32xf32> -> vector<1x32xf32>
    %269 = arith.mulf %6, %268 : vector<1x32xf32>
    %270 = vector.broadcast %257 : vector<1x32xf32> to vector<8x32xf32>
    %271 = arith.subf %253, %270 : vector<8x32xf32>
    %272 = vector.broadcast %269 : vector<1x32xf32> to vector<8x32xf32>
    %273 = arith.mulf %271, %272 : vector<8x32xf32>
    %274 = vector.broadcast %7 : vector<1x32xf32> to vector<8x32xf32>
    %275 = arith.addf %273, %274 : vector<8x32xf32>
    %276 = math.tanh %275 : vector<8x32xf32>
    %277 = arith.mulf %248, %276 : vector<8x32xf32>
    %278 = arith.index_cast %c3_i32 : i32 to index
    %c0_76 = arith.constant 0 : index
    %c0_77 = arith.constant 0 : index
    %279 = vector.load %arg9[%278, %c0_76, %c0_77] : memref<4x8x32xf32, #tpu.memory_space<vmem>>, vector<1x8x32xf32>
    %280 = vector.shape_cast %279 : vector<1x8x32xf32> to vector<8x32xf32>
    %281 = vector.shape_cast %277 : vector<8x32xf32> to vector<1x8x32xf32>
    tpu.vector_store %arg9[%278, %c0_76, %c0_77], %281 {strides = array<i32>} : memref<4x8x32xf32, #tpu.memory_space<vmem>>, vector<1x8x32xf32>,
    %c4_i32 = arith.constant 4 : i32
    %c0_78 = arith.constant 0 : index
    %c0_79 = arith.constant 0 : index
    %282 = vector.load %arg12[%c0_78, %c0_79] : memref<8x32xf32, #tpu.memory_space<vmem>>, vector<8x32xf32>
    tpu.vector_store %arg12[%c0_78, %c0_79], %277 {strides = array<i32>} : memref<8x32xf32, #tpu.memory_space<vmem>>, vector<8x32xf32>,
    %c0_80 = arith.constant 0 : index
    %c0_81 = arith.constant 0 : index
    %283 = vector.load %arg13[%c0_80, %c0_81] : memref<8x32xf32, #tpu.memory_space<vmem>>, vector<8x32xf32>
    tpu.vector_store %arg13[%c0_80, %c0_81], %253 {strides = array<i32>} : memref<8x32xf32, #tpu.memory_space<vmem>>, vector<8x32xf32>,
    %c1_i32_82 = arith.constant 1 : i32
    %284 = arith.cmpi eq, %arg0, %c1_i32_82 : i32
    %285 = arith.extui %284 : i1 to i32
    %c0_i32_83 = arith.constant 0 : i32
    %286 = arith.cmpi ne, %285, %c0_i32_83 : i32
    scf.if %286 {
      %c0_84 = arith.constant 0 : index
      %c0_85 = arith.constant 0 : index
      %287 = vector.load %arg10[%c0_84, %c0_85] : memref<8x32xf32, #tpu.memory_space<vmem>>, vector<8x32xf32>
      tpu.vector_store %arg10[%c0_84, %c0_85], %277 {strides = array<i32>} : memref<8x32xf32, #tpu.memory_space<vmem>>, vector<8x32xf32>,
      %c0_86 = arith.constant 0 : index
      %c0_87 = arith.constant 0 : index
      %288 = vector.load %arg11[%c0_86, %c0_87] : memref<8x32xf32, #tpu.memory_space<vmem>>, vector<8x32xf32>
      tpu.vector_store %arg11[%c0_86, %c0_87], %253 {strides = array<i32>} : memref<8x32xf32, #tpu.memory_space<vmem>>, vector<8x32xf32>,
    } else {
    }
    return
  }
  func.func @transform_0(%arg0: i32) -> (i32, i32, i32) {
    %c0_i32 = arith.constant 0 : i32
    %c0_i32_0 = arith.constant 0 : i32
    %c0_i32_1 = arith.constant 0 : i32
    return %arg0, %c0_i32, %c0_i32_0 : i32, i32, i32
  }
  func.func @transform_1(%arg0: i32) -> (i32, i32) {
    %c0_i32 = arith.constant 0 : i32
    %c0_i32_0 = arith.constant 0 : i32
    %c0_i32_1 = arith.constant 0 : i32
    return %c0_i32, %c0_i32_0 : i32, i32
  }
  func.func @transform_2(%arg0: i32) -> (i32, i32) {
    %c0_i32 = arith.constant 0 : i32
    %c0_i32_0 = arith.constant 0 : i32
    %c0_i32_1 = arith.constant 0 : i32
    return %c0_i32, %c0_i32_0 : i32, i32
  }
  func.func @transform_3(%arg0: i32) -> (i32, i32) {
    %c0_i32 = arith.constant 0 : i32
    %c0_i32_0 = arith.constant 0 : i32
    %c0_i32_1 = arith.constant 0 : i32
    return %c0_i32, %c0_i32_0 : i32, i32
  }
  func.func @transform_4(%arg0: i32) -> (i32, i32) {
    %c0_i32 = arith.constant 0 : i32
    %c0_i32_0 = arith.constant 0 : i32
    %c0_i32_1 = arith.constant 0 : i32
    return %c0_i32, %c0_i32_0 : i32, i32
  }
  func.func @transform_5(%arg0: i32) -> (i32, i32) {
    %c0_i32 = arith.constant 0 : i32
    %c0_i32_0 = arith.constant 0 : i32
    %c0_i32_1 = arith.constant 0 : i32
    return %c0_i32, %c0_i32_0 : i32, i32
  }
  func.func @transform_6(%arg0: i32) -> (i32, i32) {
    %c0_i32 = arith.constant 0 : i32
    %c0_i32_0 = arith.constant 0 : i32
    %c0_i32_1 = arith.constant 0 : i32
    return %c0_i32, %c0_i32_0 : i32, i32
  }
  func.func @transform_7(%arg0: i32) -> (i32, i32) {
    %c0_i32 = arith.constant 0 : i32
    %c0_i32_0 = arith.constant 0 : i32
    %c0_i32_1 = arith.constant 0 : i32
    return %c0_i32, %c0_i32_0 : i32, i32
  }
  func.func @transform_8(%arg0: i32) -> (i32, i32, i32) {
    %c0_i32 = arith.constant 0 : i32
    %c0_i32_0 = arith.constant 0 : i32
    %c0_i32_1 = arith.constant 0 : i32
    return %arg0, %c0_i32, %c0_i32_0 : i32, i32, i32
  }
  func.func @transform_9(%arg0: i32) -> (i32, i32) {
    %c0_i32 = arith.constant 0 : i32
    %c0_i32_0 = arith.constant 0 : i32
    %c0_i32_1 = arith.constant 0 : i32
    return %c0_i32, %c0_i32_0 : i32, i32
  }
  func.func @transform_10(%arg0: i32) -> (i32, i32) {
    %c0_i32 = arith.constant 0 : i32
    %c0_i32_0 = arith.constant 0 : i32
    %c0_i32_1 = arith.constant 0 : i32
    return %c0_i32, %c0_i32_0 : i32, i32
  }
}

</mosaic_0001>

<llo_original>
// kernel: tpu_custom_call.1
$region0: #{tpu_custom_call.1}
  #allocation0 [shape = 'u32[]', space=smem, size = 0x4, offset = 0x4, fixed_abs, tag = 'smem constant byte address 0x4 - core index']
  #allocation1 [shape = 'u32[144,128]{1,0:T(1,128)}', space=vmem, size = 0x12000, scoped, tag = 'internal scratch']
  #allocation2 [shape = 'f32[8,32]{1,0:T(8,128)}', space=vmem, size = 0x1000, scoped, tag = 'scratch operand']
  #allocation3 [shape = 'f32[8,32]{1,0:T(8,128)}', space=vmem, size = 0x1000, scoped, tag = 'scratch operand']
  %s0 = inlined_call_operand.hbm [shape: f32[8,8,128], index: 0, kind: input, shape index: {}]
  %s1 = inlined_call_operand.hbm [shape: f32[8,32], index: 1, kind: input, shape index: {}]
  %s2 = inlined_call_operand.hbm [shape: f32[8,32], index: 2, kind: input, shape index: {}]
  %s3 = inlined_call_operand.hbm [shape: f32[32,128], index: 3, kind: input, shape index: {}]
  %s4 = inlined_call_operand.vmem [shape: f32[1,128], index: 4, kind: input, shape index: {}]
  %s5 = inlined_call_operand.vmem [shape: f32[1,128], index: 5, kind: input, shape index: {}]
  %s6 = inlined_call_operand.vmem [shape: f32[1,32], index: 6, kind: input, shape index: {}]
  %s7 = inlined_call_operand.vmem [shape: f32[1,32], index: 7, kind: input, shape index: {}]
  %s8 = inlined_call_operand.hbm [shape: f32[8,8,32], index: 8, kind: output, shape index: {0}]
  %s9 = inlined_call_operand.hbm [shape: f32[8,32], index: 9, kind: output, shape index: {1}]
  %s10 = inlined_call_operand.hbm [shape: f32[8,32], index: 10, kind: output, shape index: {2}]
  %11 = xla_tuple %s8, %s9, %s10
  %s12 = sld [smem:[#allocation0]]
  $region105: #{tpu_custom_call.1} parent=0
    _
  %s14 = ssub.s32 1, %s12
  %s15 = scalar_select 0, %s14, %s12
  $region1: #{tpu_custom_call.1} parent=0
    #allocation4 [shape = 'u8[32768]{0}', space=vmem, size = 0x8000, scoped, tag = 'input window, operand 0']
    #allocation5 [shape = 's32[2]{0}', space=sflag, size = 0x8, scoped, tag = 'scoped memory for tpu_custom_call.1']
    #allocation6 [shape = 's32[2]{0}', space=sflag, size = 0x8, scoped, tag = 'scoped memory for tpu_custom_call.1']
    #allocation7 [shape = 'u8[4096]{0}', space=vmem, size = 0x1000, scoped, tag = 'input window, operand 1, single buffered']
    #allocation8 [shape = 's32[1]{0}', space=sflag, size = 0x4, scoped, tag = 'scoped memory for tpu_custom_call.1']
    #allocation9 [shape = 'u8[4096]{0}', space=vmem, size = 0x1000, scoped, tag = 'input window, operand 2, single buffered']
    #allocation10 [shape = 'u8[16384]{0}', space=vmem, size = 0x4000, scoped, tag = 'input window, operand 3, single buffered']
    #allocation11 [shape = 's32[1]{0}', space=sflag, size = 0x4, scoped, tag = 'scoped memory for tpu_custom_call.1']
    #allocation12 [shape = 'u8[32768]{0}', space=vmem, size = 0x8000, scoped, tag = 'output window, operand 0']
    #allocation13 [shape = 'u8[4096]{0}', space=vmem, size = 0x1000, scoped, tag = 'output window, operand 1, single buffered']
    #allocation14 [shape = 's32[1]{0}', space=sflag, size = 0x4, scoped, tag = 'scoped memory for tpu_custom_call.1']
    #allocation15 [shape = 'u8[4096]{0}', space=vmem, size = 0x1000, scoped, tag = 'output window, operand 2, single buffered']
    %16 = vsyncpa [#allocation5], 0
    %s17 = scalar_lea.sflag [#allocation5], 1
    %18 = vsyncpa %s17, 0
    %19 = vsyncpa [#allocation8], 0
    %20 = vsyncpa [#allocation11], 0
    %21 = vsyncpa [#allocation6], 0
    %s22 = scalar_lea.sflag [#allocation6], 1
    %23 = vsyncpa %s22, 0
    %24 = vsyncpa [#allocation14], 0
    loop: start=0, step=1, limit=4
    $region2: #{tpu_custom_call.1} parent=1 // loop_pre_header
      _
    $region3: #{tpu_custom_call.1} parent=1 // loop_header
      %s26 = sphi 0, %s30
      %p27 = scmp.ge.s32.totalorder %s26, 4
      %s36 = sphi 0, %s38
      %s39 = sphi 0, %s36
      %s40 = sphi 0, %s39
      %s56 = sphi 0, %s40
      %s60 = sphi 0, %s60
      %s62 = sphi 0, %s60
      %s63 = sphi 0, %s62
      %s77 = sphi 0, %s63
      %s81 = sphi 0, %s81
      %s83 = sphi 0, %s81
      %s84 = sphi 0, %s83
      %s98 = sphi 0, %s84
      %s102 = sphi 0, %s102
      %s104 = sphi 0, %s102
      %s105 = sphi 0, %s104
      %s119 = sphi 0, %s105
      %s123 = sphi 0, %s123
      %s125 = sphi 0, %s123
      %s126 = sphi 0, %s125
      %s140 = sphi 0, %s126
      %s144 = sphi 0, %s144
      %s146 = sphi 0, %s144
      %s147 = sphi 0, %s146
      %s161 = sphi 0, %s147
      %s165 = sphi 0, %s165
      %s167 = sphi 0, %s165
      %s168 = sphi 0, %s167
      %s182 = sphi 0, %s168
      %s186 = sphi 0, %s186
      %s188 = sphi 0, %s186
      %s189 = sphi 0, %s188
      %s203 = sphi 0, %s189
      %s209 = sphi 0, %s211
      %s212 = sphi 0, %s209
      %s213 = sphi 0, %s212
      %s229 = sphi 0, %s213
      %s233 = sphi 0, %s233
      %s235 = sphi 0, %s233
      %s236 = sphi 0, %s235
      %s250 = sphi 0, %s236
      %s254 = sphi 0, %s254
      %s256 = sphi 0, %s254
      %s257 = sphi 0, %s256
      %s271 = sphi 0, %s257
    $region4: #{tpu_custom_call.1} parent=1 // loop_header_branch
      %29 = sbr.rel (%p27) target = $region8
    $region5: #{tpu_custom_call.1} parent=1 // loop_body
      %s31 = ssub.s32 %s26, 1
      %s32 = ssub.s32 %s26, 2
      %s33 = sadd.s32 %s26, 1
      %s34 = ssub.s32 %s26, %s33
      %p35 = scmp.eq.s32.totalorder %s34, 0
      %s37 = sadd.s32 %s36, 1
      %s38 = scalar_select %p35, %s36, %s37
      %p41 = pneg %p35
      %p42 = scmp.eq.s32.totalorder %s26, 1
      %p43 = por %p41, %p42
      %p44 = scmp.ne.s32.totalorder %s36, %s39
      %p45 = scmp.eq.s32.totalorder %s26, 0
      %p46 = por %p44, %p45
      %p47 = scmp.ne.s32.totalorder %s36, %s39
      %p48 = scmp.eq.s32.totalorder %s31, 1
      %p49 = por %p47, %p48
      %p50 = scmp.ne.s32.totalorder %s39, %s40
      %p51 = scmp.eq.s32.totalorder %s31, 0
      %p52 = por %p50, %p51
      %p53 = scmp.ne.s32.totalorder %s39, %s40
      %p54 = scmp.eq.s32.totalorder %s32, 1
      %p55 = por %p53, %p54
      %p57 = scmp.ne.s32.totalorder %s40, %s56
      %p58 = scmp.eq.s32.totalorder %s32, 0
      %p59 = por %p57, %p58
      %s61 = sadd.s32 %s60, 1
      %p64 = scmp.eq.s32.totalorder %s26, 1
      %p65 = scmp.ne.s32.totalorder %s60, %s62
      %p66 = scmp.eq.s32.totalorder %s26, 0
      %p67 = por %p65, %p66
      %p68 = scmp.ne.s32.totalorder %s60, %s62
      %p69 = scmp.eq.s32.totalorder %s31, 1
      %p70 = por %p68, %p69
      %p71 = scmp.ne.s32.totalorder %s62, %s63
      %p72 = scmp.eq.s32.totalorder %s31, 0
      %p73 = por %p71, %p72
      %p74 = scmp.ne.s32.totalorder %s62, %s63
      %p75 = scmp.eq.s32.totalorder %s32, 1
      %p76 = por %p74, %p75
      %p78 = scmp.ne.s32.totalorder %s63, %s77
      %p79 = scmp.eq.s32.totalorder %s32, 0
      %p80 = por %p78, %p79
      %s82 = sadd.s32 %s81, 1
      %p85 = scmp.eq.s32.totalorder %s26, 1
      %p86 = scmp.ne.s32.totalorder %s81, %s83
      %p87 = scmp.eq.s32.totalorder %s26, 0
      %p88 = por %p86, %p87
      %p89 = scmp.ne.s32.totalorder %s81, %s83
      %p90 = scmp.eq.s32.totalorder %s31, 1
      %p91 = por %p89, %p90
      %p92 = scmp.ne.s32.totalorder %s83, %s84
      %p93 = scmp.eq.s32.totalorder %s31, 0
      %p94 = por %p92, %p93
      %p95 = scmp.ne.s32.totalorder %s83, %s84
      %p96 = scmp.eq.s32.totalorder %s32, 1
      %p97 = por %p95, %p96
      %p99 = scmp.ne.s32.totalorder %s84, %s98
      %p100 = scmp.eq.s32.totalorder %s32, 0
      %p101 = por %p99, %p100
      %s103 = sadd.s32 %s102, 1
      %p106 = scmp.eq.s32.totalorder %s26, 1
      %p107 = scmp.ne.s32.totalorder %s102, %s104
      %p108 = scmp.eq.s32.totalorder %s26, 0
      %p109 = por %p107, %p108
      %p110 = scmp.ne.s32.totalorder %s102, %s104
      %p111 = scmp.eq.s32.totalorder %s31, 1
      %p112 = por %p110, %p111
      %p113 = scmp.ne.s32.totalorder %s104, %s105
      %p114 = scmp.eq.s32.totalorder %s31, 0
      %p115 = por %p113, %p114
      %p116 = scmp.ne.s32.totalorder %s104, %s105
      %p117 = scmp.eq.s32.totalorder %s32, 1
      %p118 = por %p116, %p117
      %p120 = scmp.ne.s32.totalorder %s105, %s119
      %p121 = scmp.eq.s32.totalorder %s32, 0
      %p122 = por %p120, %p121
      %s124 = sadd.s32 %s123, 1
      %p127 = scmp.eq.s32.totalorder %s26, 1
      %p128 = scmp.ne.s32.totalorder %s123, %s125
      %p129 = scmp.eq.s32.totalorder %s26, 0
      %p130 = por %p128, %p129
      %p131 = scmp.ne.s32.totalorder %s123, %s125
      %p132 = scmp.eq.s32.totalorder %s31, 1
      %p133 = por %p131, %p132
      %p134 = scmp.ne.s32.totalorder %s125, %s126
      %p135 = scmp.eq.s32.totalorder %s31, 0
      %p136 = por %p134, %p135
      %p137 = scmp.ne.s32.totalorder %s125, %s126
      %p138 = scmp.eq.s32.totalorder %s32, 1
      %p139 = por %p137, %p138
      %p141 = scmp.ne.s32.totalorder %s126, %s140
      %p142 = scmp.eq.s32.totalorder %s32, 0
      %p143 = por %p141, %p142
      %s145 = sadd.s32 %s144, 1
      %p148 = scmp.eq.s32.totalorder %s26, 1
      %p149 = scmp.ne.s32.totalorder %s144, %s146
      %p150 = scmp.eq.s32.totalorder %s26, 0
      %p151 = por %p149, %p150
      %p152 = scmp.ne.s32.totalorder %s144, %s146
      %p153 = scmp.eq.s32.totalorder %s31, 1
      %p154 = por %p152, %p153
      %p155 = scmp.ne.s32.totalorder %s146, %s147
      %p156 = scmp.eq.s32.totalorder %s31, 0
      %p157 = por %p155, %p156
      %p158 = scmp.ne.s32.totalorder %s146, %s147
      %p159 = scmp.eq.s32.totalorder %s32, 1
      %p160 = por %p158, %p159
      %p162 = scmp.ne.s32.totalorder %s147, %s161
      %p163 = scmp.eq.s32.totalorder %s32, 0
      %p164 = por %p162, %p163
      %s166 = sadd.s32 %s165, 1
      %p169 = scmp.eq.s32.totalorder %s26, 1
      %p170 = scmp.ne.s32.totalorder %s165, %s167
      %p171 = scmp.eq.s32.totalorder %s26, 0
      %p172 = por %p170, %p171
      %p173 = scmp.ne.s32.totalorder %s165, %s167
      %p174 = scmp.eq.s32.totalorder %s31, 1
      %p175 = por %p173, %p174
      %p176 = scmp.ne.s32.totalorder %s167, %s168
      %p177 = scmp.eq.s32.totalorder %s31, 0
      %p178 = por %p176, %p177
      %p179 = scmp.ne.s32.totalorder %s167, %s168
      %p180 = scmp.eq.s32.totalorder %s32, 1
      %p181 = por %p179, %p180
      %p183 = scmp.ne.s32.totalorder %s168, %s182
      %p184 = scmp.eq.s32.totalorder %s32, 0
      %p185 = por %p183, %p184
      %s187 = sadd.s32 %s186, 1
      %p190 = scmp.eq.s32.totalorder %s26, 1
      %p191 = scmp.ne.s32.totalorder %s186, %s188
      %p192 = scmp.eq.s32.totalorder %s26, 0
      %p193 = por %p191, %p192
      %p194 = scmp.ne.s32.totalorder %s186, %s188
      %p195 = scmp.eq.s32.totalorder %s31, 1
      %p196 = por %p194, %p195
      %p197 = scmp.ne.s32.totalorder %s188, %s189
      %p198 = scmp.eq.s32.totalorder %s31, 0
      %p199 = por %p197, %p198
      %p200 = scmp.ne.s32.totalorder %s188, %s189
      %p201 = scmp.eq.s32.totalorder %s32, 1
      %p202 = por %p200, %p201
      %p204 = scmp.ne.s32.totalorder %s189, %s203
      %p205 = scmp.eq.s32.totalorder %s32, 0
      %p206 = por %p204, %p205
      %s207 = ssub.s32 %s26, %s33
      %p208 = scmp.eq.s32.totalorder %s207, 0
      %s210 = sadd.s32 %s209, 1
      %s211 = scalar_select %p208, %s209, %s210
      %p214 = pneg %p208
      %p215 = scmp.eq.s32.totalorder %s26, 1
      %p216 = por %p214, %p215
      %p217 = scmp.ne.s32.totalorder %s209, %s212
      %p218 = scmp.eq.s32.totalorder %s26, 0
      %p219 = por %p217, %p218
      %p220 = scmp.ne.s32.totalorder %s209, %s212
      %p221 = scmp.eq.s32.totalorder %s31, 1
      %p222 = por %p220, %p221
      %p223 = scmp.ne.s32.totalorder %s212, %s213
      %p224 = scmp.eq.s32.totalorder %s31, 0
      %p225 = por %p223, %p224
      %p226 = scmp.ne.s32.totalorder %s212, %s213
      %p227 = scmp.eq.s32.totalorder %s32, 1
      %p228 = por %p226, %p227
      %p230 = scmp.ne.s32.totalorder %s213, %s229
      %p231 = scmp.eq.s32.totalorder %s32, 0
      %p232 = por %p230, %p231
      %s234 = sadd.s32 %s233, 1
      %p237 = scmp.eq.s32.totalorder %s26, 1
      %p238 = scmp.ne.s32.totalorder %s233, %s235
      %p239 = scmp.eq.s32.totalorder %s26, 0
      %p240 = por %p238, %p239
      %p241 = scmp.ne.s32.totalorder %s233, %s235
      %p242 = scmp.eq.s32.totalorder %s31, 1
      %p243 = por %p241, %p242
      %p244 = scmp.ne.s32.totalorder %s235, %s236
      %p245 = scmp.eq.s32.totalorder %s31, 0
      %p246 = por %p244, %p245
      %p247 = scmp.ne.s32.totalorder %s235, %s236
      %p248 = scmp.eq.s32.totalorder %s32, 1
      %p249 = por %p247, %p248
      %p251 = scmp.ne.s32.totalorder %s236, %s250
      %p252 = scmp.eq.s32.totalorder %s32, 0
      %p253 = por %p251, %p252
      %s255 = sadd.s32 %s254, 1
      %p258 = scmp.eq.s32.totalorder %s26, 1
      %p259 = scmp.ne.s32.totalorder %s254, %s256
      %p260 = scmp.eq.s32.totalorder %s26, 0
      %p261 = por %p259, %p260
      %p262 = scmp.ne.s32.totalorder %s254, %s256
      %p263 = scmp.eq.s32.totalorder %s31, 1
      %p264 = por %p262, %p263
      %p265 = scmp.ne.s32.totalorder %s256, %s257
      %p266 = scmp.eq.s32.totalorder %s31, 0
      %p267 = por %p265, %p266
      %p268 = scmp.ne.s32.totalorder %s256, %s257
      %p269 = scmp.eq.s32.totalorder %s32, 1
      %p270 = por %p268, %p269
      %p272 = scmp.ne.s32.totalorder %s257, %s271
      %p273 = scmp.eq.s32.totalorder %s32, 0
      %p274 = por %p272, %p273
      %p275 = scmp.le.s32.totalorder 1, %s26
      %p276 = scmp.lt.s32.totalorder %s26, 3
      %p277 = pnand %p275, %p276
      %p278 = pneg %p277
      // Predicated region
      $region9: #{tpu_custom_call.1} parent=5 // pred_check
        _
      $region10: #{tpu_custom_call.1} parent=5 // pred_check_branch
        %280 = sbr.rel (%p277) target = $region12
      $region11: #{tpu_custom_call.1} parent=5 // pred_region
        %s281 = ssub.s32 %s26, 1
        // Predicated region
        $region13: #{tpu_custom_call.1} parent=11 // pred_check
          %p282 = pneg %p73
        $region14: #{tpu_custom_call.1} parent=11 // pred_check_branch
          %284 = sbr.rel (%p282) target = $region16
        $region15: #{tpu_custom_call.1} parent=11 // pred_region
          %s286 = ssub.s32 128, 128
          %287 = vsyncadd [#allocation8], %s286
          %s289 = sshll.u32 [#allocation7], 4
          %s290 = int_to_ptr.vmem [resolvable:$true] %s289
          %292 = dma.hbm_to_vmem [thread:$0]  %s1, 128, %s290, [#allocation8]
        $region16: #{tpu_custom_call.1} parent=11 // pred_fallthru
          _
        // Predicated region
        $region17: #{tpu_custom_call.1} parent=11 // pred_check
          %p293 = pneg %p94
        $region18: #{tpu_custom_call.1} parent=11 // pred_check_branch
          %295 = sbr.rel (%p293) target = $region20
        $region19: #{tpu_custom_call.1} parent=11 // pred_region
          %s297 = ssub.s32 128, 128
          %298 = vsyncadd [#allocation8], %s297
          %s300 = sshll.u32 [#allocation9], 4
          %s301 = int_to_ptr.vmem [resolvable:$true] %s300
          %303 = dma.hbm_to_vmem [thread:$0]  %s2, 128, %s301, [#allocation8]
        $region20: #{tpu_custom_call.1} parent=11 // pred_fallthru
          _
        // Predicated region
        $region21: #{tpu_custom_call.1} parent=11 // pred_check
          %p304 = pneg %p115
        $region22: #{tpu_custom_call.1} parent=11 // pred_check_branch
          %306 = sbr.rel (%p304) target = $region24
        $region23: #{tpu_custom_call.1} parent=11 // pred_region
          %s308 = ssub.s32 512, 512
          %309 = vsyncadd [#allocation11], %s308
          %s310 = sshll.u32 [#allocation10], 4
          %s311 = int_to_ptr.vmem [resolvable:$true] %s310
          %316 = dma.hbm_to_vmem [thread:$0]  %s3, 512, %s311, [#allocation11], 128, 128, 8
        $region24: #{tpu_custom_call.1} parent=11 // pred_fallthru
          _
        // Predicated region
        $region25: #{tpu_custom_call.1} parent=11 // pred_check
          %p317 = pneg %p136
        $region26: #{tpu_custom_call.1} parent=11 // pred_check_branch
          %319 = sbr.rel (%p317) target = $region28
        $region27: #{tpu_custom_call.1} parent=11 // pred_region
          _
        $region28: #{tpu_custom_call.1} parent=11 // pred_fallthru
          _
        // Predicated region
        $region29: #{tpu_custom_call.1} parent=11 // pred_check
          %p320 = pneg %p157
        $region30: #{tpu_custom_call.1} parent=11 // pred_check_branch
          %322 = sbr.rel (%p320) target = $region32
        $region31: #{tpu_custom_call.1} parent=11 // pred_region
          _
        $region32: #{tpu_custom_call.1} parent=11 // pred_fallthru
          _
        // Predicated region
        $region33: #{tpu_custom_call.1} parent=11 // pred_check
          %p323 = pneg %p178
        $region34: #{tpu_custom_call.1} parent=11 // pred_check_branch
          %325 = sbr.rel (%p323) target = $region36
        $region35: #{tpu_custom_call.1} parent=11 // pred_region
          _
        $region36: #{tpu_custom_call.1} parent=11 // pred_fallthru
          _
        // Predicated region
        $region37: #{tpu_custom_call.1} parent=11 // pred_check
          %p326 = pneg %p199
        $region38: #{tpu_custom_call.1} parent=11 // pred_check_branch
          %328 = sbr.rel (%p326) target = $region40
        $region39: #{tpu_custom_call.1} parent=11 // pred_region
          _
        $region40: #{tpu_custom_call.1} parent=11 // pred_fallthru
          _
      $region12: #{tpu_custom_call.1} parent=5 // pred_fallthru
        _
      %p329 = scmp.lt.s32.totalorder %s26, 2
      // Predicated region
      $region41: #{tpu_custom_call.1} parent=5 // pred_check
        %p330 = pneg %p329
      $region42: #{tpu_custom_call.1} parent=5 // pred_check_branch
        %332 = sbr.rel (%p330) target = $region44
      $region43: #{tpu_custom_call.1} parent=5 // pred_region
        // Predicated region
        $region45: #{tpu_custom_call.1} parent=43 // pred_check
          %p333 = pneg %p46
        $region46: #{tpu_custom_call.1} parent=43 // pred_check_branch
          %335 = sbr.rel (%p333) target = $region48
        $region47: #{tpu_custom_call.1} parent=43 // pred_region
          %s336 = sand.u32 %s36, 1
          %s337 = scalar_lea.sflag [#allocation5], %s336
          %s338 = sand.u32 %s36, 1
          %s339 = smul.addr %s338, 32
          %s340 = scalar_lea.vmem [#allocation4], %s339
          %s341 = smul.u32 4, %s26
          %s343 = ssub.s32 512, 512
          %344 = vsyncadd %s337, %s343
          %s345 = smul.addr %s341, 128
          %s346 = scalar_lea.hbm %s0, %s345
          %s347 = sshll.u32 %s340, 4
          %s348 = int_to_ptr.vmem [resolvable:$true] %s347
          %353 = dma.hbm_to_vmem [thread:$0]  %s346, 512, %s348, %s337, 128, 128, 8
        $region48: #{tpu_custom_call.1} parent=43 // pred_fallthru
          _
      $region44: #{tpu_custom_call.1} parent=5 // pred_fallthru
        _
      %p354 = scmp.le.s32.totalorder 1, %s26
      %p355 = scmp.lt.s32.totalorder %s26, 3
      %p356 = pnand %p354, %p355
      %p357 = pneg %p356
      // Predicated region
      $region49: #{tpu_custom_call.1} parent=5 // pred_check
        _
      $region50: #{tpu_custom_call.1} parent=5 // pred_check_branch
        %359 = sbr.rel (%p356) target = $region52
      $region51: #{tpu_custom_call.1} parent=5 // pred_region
        %s360 = ssub.s32 %s26, 1
        %s361 = sand.u32 %s39, 1
        %s362 = scalar_lea.sflag [#allocation5], %s361
        %s363 = sand.u32 %s39, 1
        %s364 = smul.addr %s363, 32
        %s365 = scalar_lea.vmem [#allocation4], %s364
        // Predicated region
        $region53: #{tpu_custom_call.1} parent=51 // pred_check
          %p366 = pneg %p52
        $region54: #{tpu_custom_call.1} parent=51 // pred_check_branch
          %368 = sbr.rel (%p366) target = $region56
        $region55: #{tpu_custom_call.1} parent=51 // pred_region
          %369 = dma.done %s362, 512
        $region56: #{tpu_custom_call.1} parent=51 // pred_fallthru
          _
        // Predicated region
        $region57: #{tpu_custom_call.1} parent=51 // pred_check
          %p370 = pneg %p73
        $region58: #{tpu_custom_call.1} parent=51 // pred_check_branch
          %372 = sbr.rel (%p370) target = $region60
        $region59: #{tpu_custom_call.1} parent=51 // pred_region
          %373 = dma.done [#allocation8], 128
        $region60: #{tpu_custom_call.1} parent=51 // pred_fallthru
          _
        // Predicated region
        $region61: #{tpu_custom_call.1} parent=51 // pred_check
          %p374 = pneg %p94
        $region62: #{tpu_custom_call.1} parent=51 // pred_check_branch
          %376 = sbr.rel (%p374) target = $region64
        $region63: #{tpu_custom_call.1} parent=51 // pred_region
          %377 = dma.done [#allocation8], 128
        $region64: #{tpu_custom_call.1} parent=51 // pred_fallthru
          _
        // Predicated region
        $region65: #{tpu_custom_call.1} parent=51 // pred_check
          %p378 = pneg %p115
        $region66: #{tpu_custom_call.1} parent=51 // pred_check_branch
          %380 = sbr.rel (%p378) target = $region68
        $region67: #{tpu_custom_call.1} parent=51 // pred_region
          %381 = dma.done [#allocation11], 512
        $region68: #{tpu_custom_call.1} parent=51 // pred_fallthru
          _
        %s382 = sand.u32 %s39, 1
        %s383 = scalar_lea.sflag [#allocation5], %s382
        %s384 = sand.u32 %s39, 1
        %s385 = smul.addr %s384, 32
        %s386 = scalar_lea.vmem [#allocation4], %s385
        %p387 = pneg %p52
        %p388 = pneg %p49
        %p389 = pneg %p73
        %p390 = pneg %p70
        %p391 = pneg %p94
        %p392 = pneg %p91
        %p393 = pneg %p115
        %p394 = pneg %p112
        %p395 = pneg %p136
        %p396 = pneg %p133
        %p397 = pneg %p157
        %p398 = pneg %p154
        %p399 = pneg %p178
        %p400 = pneg %p175
        %p401 = pneg %p199
        %p402 = pneg %p196
        %p403 = pneg %p225
        %p404 = pneg %p222
        %s405 = sand.u32 %s212, 1
        %s406 = scalar_lea.sflag [#allocation6], %s405
        %s407 = sand.u32 %s212, 1
        %s408 = smul.addr %s407, 32
        %s409 = scalar_lea.vmem [#allocation12], %s408
        %p410 = pneg %p246
        %p411 = pneg %p243
        %p412 = pneg %p267
        %p413 = pneg %p264
        %s414 = smul.u32 4, %s31
        %s415 = smul.u32 4, %s31
        %p416 = scmp.eq.s32.totalorder %s31, 0
        // Predicated region
        $region69: #{tpu_custom_call.1} parent=51 // pred_check
          %p417 = pneg %p416
        $region70: #{tpu_custom_call.1} parent=51 // pred_check_branch
          %419 = sbr.rel (%p417) target = $region72
        $region71: #{tpu_custom_call.1} parent=51 // pred_region
          %v420 = vld [vmem:[#allocation7] sm:$0xff]
          %vm421 = vcmask 261120
          %422 = vst.msk [vmem:[#allocation2] sm:$0xff] %vm421, %v420
          %v423 = vld [vmem:[#allocation9] sm:$0xff]
          %424 = vst.msk [vmem:[#allocation3] sm:$0xff] %vm421, %v423
        $region72: #{tpu_custom_call.1} parent=51 // pred_fallthru
          _
        %v425 = vld [vmem:[#allocation10] sm:$0xff]
        %v426 = vld [vmem:[#allocation10 + $0x8] sm:$0xff]
        %v427 = vld [vmem:[#allocation10 + $0x10] sm:$0xff]
        %v428 = vld [vmem:[#allocation10 + $0x18] sm:$0xff]
        %v429 = vld [vmem:[%s4] sm:$0x1]
        %v430 = vld [vmem:[%s5] sm:$0x1]
        %v431 = vld [vmem:[%s6] sm:$0x1]
        %v432 = vld [vmem:[%s7] sm:$0x1]
        %v433 = vld [vmem:[#allocation2] sm:$0xff]
        %v434 = vld [vmem:[#allocation3] sm:$0xff]
        %vm435 = vcmask 261120
        %v437 = vsel %vm435, %v433, 0
        %439 = vmatprep.subr.mxu0 0.0
        %440 = vmatpush1.msra.mxu0 %v425
        %441 = vmatprep.subr.mxu0 0.0
        %442 = vmatpush1.msra.mxu0 %v426
        %443 = vmatprep.subr.mxu0 0.0
        %444 = vmatpush1.msra.mxu0 %v427
        %445 = vmatprep.subr.mxu0 0.0
        %446 = vmatpush1.msra.mxu0 %v428
        %447 = vmatprep.subr.mxu0 0.0
        %448 = vmatpush1.msra.mxu0 0.0
        %449 = vmatprep.subr.mxu0 0.0
        %450 = vmatpush1.msra.mxu0 0.0
        %451 = vmatprep.subr.mxu0 0.0
        %452 = vmatpush1.msra.mxu0 0.0
        %453 = vmatprep.subr.mxu0 0.0
        %454 = vmatpush1.msra.mxu0 0.0
        %455 = vmatprep.subr.mxu0 0.0
        %456 = vmatpush1.msra.mxu0 0.0
        %457 = vmatprep.subr.mxu0 0.0
        %458 = vmatpush1.msra.mxu0 0.0
        %459 = vmatprep.subr.mxu0 0.0
        %460 = vmatpush1.msra.mxu0 0.0
        %461 = vmatprep.subr.mxu0 0.0
        %462 = vmatpush1.msra.mxu0 0.0
        %463 = vmatprep.subr.mxu0 0.0
        %464 = vmatpush1.msra.mxu0 0.0
        %465 = vmatprep.subr.mxu0 0.0
        %466 = vmatpush1.msra.mxu0 0.0
        %467 = vmatprep.subr.mxu0 0.0
        %468 = vmatpush1.msra.mxu0 0.0
        %469 = vmatprep.subr.mxu0 0.0
        %470 = vmatpush1.msra.mxu0 0.0
        %471 = vmatprep.subr.mxu0 0.0
        %472 = vmatpush1.msra.mxu0 0.0
        %473 = vmatprep.subr.mxu0 0.0
        %474 = vmatpush1.msra.mxu0 0.0
        %475 = vmatprep.subr.mxu0 0.0
        %476 = vmatpush1.msra.mxu0 0.0
        %477 = vmatprep.subr.mxu0 0.0
        %478 = vmatpush1.msra.mxu0 0.0
        %479 = vmatprep.subr.mxu0 0.0
        %480 = vmatpush1.msra.mxu0 0.0
        %481 = vmatprep.subr.mxu0 0.0
        %482 = vmatpush1.msra.mxu0 0.0
        %483 = vmatprep.subr.mxu0 0.0
        %484 = vmatpush1.msra.mxu0 0.0
        %485 = vmatprep.subr.mxu0 0.0
        %486 = vmatpush1.msra.mxu0 0.0
        %487 = vmatprep.subr.mxu0 0.0
        %488 = vmatpush1.msra.mxu0 0.0
        %489 = vmatprep.subr.mxu0 0.0
        %490 = vmatpush1.msra.mxu0 0.0
        %491 = vmatprep.subr.mxu0 0.0
        %492 = vmatpush1.msra.mxu0 0.0
        %493 = vmatprep.subr.mxu0 0.0
        %494 = vmatpush1.msra.mxu0 0.0
        %495 = vmatprep.subr.mxu0 0.0
        %496 = vmatpush1.msra.mxu0 0.0
        %497 = vmatprep.subr.mxu0 0.0
        %498 = vmatpush1.msra.mxu0 0.0
        %499 = vmatprep.subr.mxu0 0.0
        %500 = vmatpush1.msra.mxu0 0.0
        %501 = vmatprep.subr.mxu0 0.0
        %502 = vmatpush1.msra.mxu0 0.0
        %503 = vmatprep.mubr.f32.mxu0 0.0
        %504 = vmatmul.mubr.f32.gmra.mrb[0].mxu0 %v437
        %v505 = vpop.f32.mrb[0].mxu0
        %v506 = vadd.f32 0.0, %v505
        %v507 = vpop.f32.mrb[0].mxu0
        %508 = vdwg.mxu0
        %v509 = vrot.slane %v506, 4
        %v510 = vadd.f32 %v506, %v509
        %v511 = vrot.slane %v510, 2
        %v512 = vadd.f32 %v510, %v511
        %v513 = vrot.slane %v512, 1
        %v514 = vadd.f32 %v512, %v513
        %v515 = vrcp.pop 8.0
        %v516 = vmul.f32 %v514, %v515
        %v517 = vsub.f32 %v506, %v516
        %v518 = vmul.f32 %v517, %v517
        %v519 = vrot.slane %v518, 4
        %v520 = vadd.f32 %v518, %v519
        %v521 = vrot.slane %v520, 2
        %v522 = vadd.f32 %v520, %v521
        %v523 = vrot.slane %v522, 1
        %v524 = vadd.f32 %v522, %v523
        %v525 = vmul.f32 %v524, %v515
        %v526 = vrsqrt.pop %v525
        %v527 = vmul.f32 %v525, %v526
        %vm528 = vcmp.eq.f32.partialorder %v525, inf
        %v529 = vsel %vm528, %v525, %v527
        %vm530 = vcmp.eq.f32.partialorder %v525, 0.0
        %v531 = vand.u32 %v525, 2147483648
        %v532 = vsel %vm530, %v531, %v529
        %v533 = vadd.f32 %v532, 1e-05
        %v534 = vrcp.pop %v533
        %v535 = vmul.f32 %v429, %v534
        %v537 = vlaneseq
        %v538 = vshrl.u32 %v537, 7
        %v539 = vsub.s32 0, %v538
        %v540 = vrot.slane %v535, %v539
        %v542 = vmul.f32 %v517, %v540
        %v544 = vlaneseq
        %v545 = vshrl.u32 %v544, 7
        %v546 = vsub.s32 0, %v545
        %v547 = vrot.slane %v430, %v546
        %v549 = vadd.f32 %v542, %v547
        %v550 = vld [vmem:[%s365] sm:$0xff]
        %v551 = vadd.f32 %v549, %v550
        %v552 = vxor.u32 %v551, 2147483648
        %v553 = vmul.f32 %v552, 1.442695
        %v554 = vpow.pop %v553
        %v555 = vadd.f32 %v554, 1.0
        %v556 = vrcp.pop %v555
        %v557 = vmul.f32 1.0, %v556
        %v558 = vtanh.pop %v551
        %v559 = vmul.f32 %v557, %v434
        %561 = vrot.lane.b32.xlu0 %v558, 64
        %v562 = vpop.permute.xlu0 %561
        %v564 = vmul.f32 %v557, %v562
        %566 = vrot.lane.b32.xlu0 %v564, 96
        %v567 = vpop.permute.xlu0 %566
        %v569 = vadd.f32 %v559, %v567
        %v570 = vsel %vm435, %v569, 0.0
        %v571 = vrot.slane %v570, 4
        %v572 = vadd.f32 %v570, %v571
        %v573 = vrot.slane %v572, 2
        %v574 = vadd.f32 %v572, %v573
        %v575 = vrot.slane %v574, 1
        %v576 = vadd.f32 %v574, %v575
        %v577 = vmul.f32 %v576, %v515
        %v578 = vsub.f32 %v569, %v577
        %v579 = vmul.f32 %v578, %v578
        %v580 = vsel %vm435, %v579, 0.0
        %v581 = vrot.slane %v580, 4
        %v582 = vadd.f32 %v580, %v581
        %v583 = vrot.slane %v582, 2
        %v584 = vadd.f32 %v582, %v583
        %v585 = vrot.slane %v584, 1
        %v586 = vadd.f32 %v584, %v585
        %v587 = vmul.f32 %v586, %v515
        %v588 = vrsqrt.pop %v587
        %v589 = vmul.f32 %v587, %v588
        %vm590 = vcmp.eq.f32.partialorder %v587, inf
        %v591 = vsel %vm590, %v587, %v589
        %vm592 = vcmp.eq.f32.partialorder %v587, 0.0
        %v593 = vand.u32 %v587, 2147483648
        %v594 = vsel %vm592, %v593, %v591
        %v595 = vadd.f32 %v594, 1e-05
        %v596 = vrcp.pop %v595
        %v597 = vmul.f32 %v431, %v596
        %v599 = vlaneseq
        %v600 = vshrl.u32 %v599, 7
        %v601 = vsub.s32 0, %v600
        %v602 = vrot.slane %v597, %v601
        %v604 = vmul.f32 %v578, %v602
        %v606 = vlaneseq
        %v607 = vshrl.u32 %v606, 7
        %v608 = vsub.s32 0, %v607
        %v609 = vrot.slane %v432, %v608
        %v611 = vadd.f32 %v604, %v609
        %v612 = vtanh.pop %v611
        %614 = vrot.lane.b32.xlu0 %v612, 64
        %v615 = vpop.permute.xlu0 %614
        %v617 = vmul.f32 %v557, %v615
        %619 = vrot.lane.b32.xlu0 %v617, 64
        %v620 = vpop.permute.xlu0 %619
        %622 = vst.msk [vmem:[%s409] sm:$0xff] %vm435, %v620
        %v623 = vsel %vm435, %v620, 0
        %625 = vmatprep.subr.mxu0 0.0
        %626 = vmatpush1.msra.mxu0 %v425
        %627 = vmatprep.subr.mxu0 0.0
        %628 = vmatpush1.msra.mxu0 %v426
        %629 = vmatprep.subr.mxu0 0.0
        %630 = vmatpush1.msra.mxu0 %v427
        %631 = vmatprep.subr.mxu0 0.0
        %632 = vmatpush1.msra.mxu0 %v428
        %633 = vmatprep.subr.mxu0 0.0
        %634 = vmatpush1.msra.mxu0 0.0
        %635 = vmatprep.subr.mxu0 0.0
        %636 = vmatpush1.msra.mxu0 0.0
        %637 = vmatprep.subr.mxu0 0.0
        %638 = vmatpush1.msra.mxu0 0.0
        %639 = vmatprep.subr.mxu0 0.0
        %640 = vmatpush1.msra.mxu0 0.0
        %641 = vmatprep.subr.mxu0 0.0
        %642 = vmatpush1.msra.mxu0 0.0
        %643 = vmatprep.subr.mxu0 0.0
        %644 = vmatpush1.msra.mxu0 0.0
        %645 = vmatprep.subr.mxu0 0.0
        %646 = vmatpush1.msra.mxu0 0.0
        %647 = vmatprep.subr.mxu0 0.0
        %648 = vmatpush1.msra.mxu0 0.0
        %649 = vmatprep.subr.mxu0 0.0
        %650 = vmatpush1.msra.mxu0 0.0
        %651 = vmatprep.subr.mxu0 0.0
        %652 = vmatpush1.msra.mxu0 0.0
        %653 = vmatprep.subr.mxu0 0.0
        %654 = vmatpush1.msra.mxu0 0.0
        %655 = vmatprep.subr.mxu0 0.0
        %656 = vmatpush1.msra.mxu0 0.0
        %657 = vmatprep.subr.mxu0 0.0
        %658 = vmatpush1.msra.mxu0 0.0
        %659 = vmatprep.subr.mxu0 0.0
        %660 = vmatpush1.msra.mxu0 0.0
        %661 = vmatprep.subr.mxu0 0.0
        %662 = vmatpush1.msra.mxu0 0.0
        %663 = vmatprep.subr.mxu0 0.0
        %664 = vmatpush1.msra.mxu0 0.0
        %665 = vmatprep.subr.mxu0 0.0
        %666 = vmatpush1.msra.mxu0 0.0
        %667 = vmatprep.subr.mxu0 0.0
        %668 = vmatpush1.msra.mxu0 0.0
        %669 = vmatprep.subr.mxu0 0.0
        %670 = vmatpush1.msra.mxu0 0.0
        %671 = vmatprep.subr.mxu0 0.0
        %672 = vmatpush1.msra.mxu0 0.0
        %673 = vmatprep.subr.mxu0 0.0
        %674 = vmatpush1.msra.mxu0 0.0
        %675 = vmatprep.subr.mxu0 0.0
        %676 = vmatpush1.msra.mxu0 0.0
        %677 = vmatprep.subr.mxu0 0.0
        %678 = vmatpush1.msra.mxu0 0.0
        %679 = vmatprep.subr.mxu0 0.0
        %680 = vmatpush1.msra.mxu0 0.0
        %681 = vmatprep.subr.mxu0 0.0
        %682 = vmatpush1.msra.mxu0 0.0
        %683 = vmatprep.subr.mxu0 0.0
        %684 = vmatpush1.msra.mxu0 0.0
        %685 = vmatprep.subr.mxu0 0.0
        %686 = vmatpush1.msra.mxu0 0.0
        %687 = vmatprep.subr.mxu0 0.0
        %688 = vmatpush1.msra.mxu0 0.0
        %689 = vmatprep.mubr.f32.mxu0 0.0
        %690 = vmatmul.mubr.f32.gmra.mrb[0].mxu0 %v623
        %v691 = vpop.f32.mrb[0].mxu0
        %v692 = vadd.f32 0.0, %v691
        %v693 = vpop.f32.mrb[0].mxu0
        %694 = vdwg.mxu0
        %v695 = vrot.slane %v692, 4
        %v696 = vadd.f32 %v692, %v695
        %v697 = vrot.slane %v696, 2
        %v698 = vadd.f32 %v696, %v697
        %v699 = vrot.slane %v698, 1
        %v700 = vadd.f32 %v698, %v699
        %v701 = vmul.f32 %v700, %v515
        %v702 = vsub.f32 %v692, %v701
        %v703 = vmul.f32 %v702, %v702
        %v704 = vrot.slane %v703, 4
        %v705 = vadd.f32 %v703, %v704
        %v706 = vrot.slane %v705, 2
        %v707 = vadd.f32 %v705, %v706
        %v708 = vrot.slane %v707, 1
        %v709 = vadd.f32 %v707, %v708
        %v710 = vmul.f32 %v709, %v515
        %v711 = vrsqrt.pop %v710
        %v712 = vmul.f32 %v710, %v711
        %vm713 = vcmp.eq.f32.partialorder %v710, inf
        %v714 = vsel %vm713, %v710, %v712
        %vm715 = vcmp.eq.f32.partialorder %v710, 0.0
        %v716 = vand.u32 %v710, 2147483648
        %v717 = vsel %vm715, %v716, %v714
        %v718 = vadd.f32 %v717, 1e-05
        %v719 = vrcp.pop %v718
        %v720 = vmul.f32 %v429, %v719
        %v722 = vlaneseq
        %v723 = vshrl.u32 %v722, 7
        %v724 = vsub.s32 0, %v723
        %v725 = vrot.slane %v720, %v724
        %v727 = vmul.f32 %v702, %v725
        %v728 = vadd.f32 %v727, %v547
        %s729 = scalar_lea.vmem %s365, 8 [#allocation4]
        %v730 = vld [vmem:[%s729] sm:$0xff]
        %v731 = vadd.f32 %v728, %v730
        %v732 = vxor.u32 %v731, 2147483648
        %v733 = vmul.f32 %v732, 1.442695
        %v734 = vpow.pop %v733
        %v735 = vadd.f32 %v734, 1.0
        %v736 = vrcp.pop %v735
        %v737 = vmul.f32 1.0, %v736
        %v738 = vtanh.pop %v731
        %v739 = vmul.f32 %v737, %v569
        %741 = vrot.lane.b32.xlu0 %v738, 64
        %v742 = vpop.permute.xlu0 %741
        %v744 = vmul.f32 %v737, %v742
        %746 = vrot.lane.b32.xlu0 %v744, 96
        %v747 = vpop.permute.xlu0 %746
        %v749 = vadd.f32 %v739, %v747
        %v750 = vsel %vm435, %v749, 0.0
        %v751 = vrot.slane %v750, 4
        %v752 = vadd.f32 %v750, %v751
        %v753 = vrot.slane %v752, 2
        %v754 = vadd.f32 %v752, %v753
        %v755 = vrot.slane %v754, 1
        %v756 = vadd.f32 %v754, %v755
        %v757 = vmul.f32 %v756, %v515
        %v758 = vsub.f32 %v749, %v757
        %v759 = vmul.f32 %v758, %v758
        %v760 = vsel %vm435, %v759, 0.0
        %v761 = vrot.slane %v760, 4
        %v762 = vadd.f32 %v760, %v761
        %v763 = vrot.slane %v762, 2
        %v764 = vadd.f32 %v762, %v763
        %v765 = vrot.slane %v764, 1
        %v766 = vadd.f32 %v764, %v765
        %v767 = vmul.f32 %v766, %v515
        %v768 = vrsqrt.pop %v767
        %v769 = vmul.f32 %v767, %v768
        %vm770 = vcmp.eq.f32.partialorder %v767, inf
        %v771 = vsel %vm770, %v767, %v769
        %vm772 = vcmp.eq.f32.partialorder %v767, 0.0
        %v773 = vand.u32 %v767, 2147483648
        %v774 = vsel %vm772, %v773, %v771
        %v775 = vadd.f32 %v774, 1e-05
        %v776 = vrcp.pop %v775
        %v777 = vmul.f32 %v431, %v776
        %v779 = vlaneseq
        %v780 = vshrl.u32 %v779, 7
        %v781 = vsub.s32 0, %v780
        %v782 = vrot.slane %v777, %v781
        %v784 = vmul.f32 %v758, %v782
        %v785 = vadd.f32 %v784, %v609
        %v786 = vtanh.pop %v785
        %788 = vrot.lane.b32.xlu0 %v786, 64
        %v789 = vpop.permute.xlu0 %788
        %v791 = vmul.f32 %v737, %v789
        %793 = vrot.lane.b32.xlu0 %v791, 64
        %v794 = vpop.permute.xlu0 %793
        %s796 = scalar_lea.vmem %s409, 8 [#allocation12]
        %797 = vst.msk [vmem:[%s796] sm:$0xff] %vm435, %v794
        %v798 = vsel %vm435, %v794, 0
        %800 = vmatprep.subr.mxu0 0.0
        %801 = vmatpush1.msra.mxu0 %v425
        %802 = vmatprep.subr.mxu0 0.0
        %803 = vmatpush1.msra.mxu0 %v426
        %804 = vmatprep.subr.mxu0 0.0
        %805 = vmatpush1.msra.mxu0 %v427
        %806 = vmatprep.subr.mxu0 0.0
        %807 = vmatpush1.msra.mxu0 %v428
        %808 = vmatprep.subr.mxu0 0.0
        %809 = vmatpush1.msra.mxu0 0.0
        %810 = vmatprep.subr.mxu0 0.0
        %811 = vmatpush1.msra.mxu0 0.0
        %812 = vmatprep.subr.mxu0 0.0
        %813 = vmatpush1.msra.mxu0 0.0
        %814 = vmatprep.subr.mxu0 0.0
        %815 = vmatpush1.msra.mxu0 0.0
        %816 = vmatprep.subr.mxu0 0.0
        %817 = vmatpush1.msra.mxu0 0.0
        %818 = vmatprep.subr.mxu0 0.0
        %819 = vmatpush1.msra.mxu0 0.0
        %820 = vmatprep.subr.mxu0 0.0
        %821 = vmatpush1.msra.mxu0 0.0
        %822 = vmatprep.subr.mxu0 0.0
        %823 = vmatpush1.msra.mxu0 0.0
        %824 = vmatprep.subr.mxu0 0.0
        %825 = vmatpush1.msra.mxu0 0.0
        %826 = vmatprep.subr.mxu0 0.0
        %827 = vmatpush1.msra.mxu0 0.0
        %828 = vmatprep.subr.mxu0 0.0
        %829 = vmatpush1.msra.mxu0 0.0
        %830 = vmatprep.subr.mxu0 0.0
        %831 = vmatpush1.msra.mxu0 0.0
        %832 = vmatprep.subr.mxu0 0.0
        %833 = vmatpush1.msra.mxu0 0.0
        %834 = vmatprep.subr.mxu0 0.0
        %835 = vmatpush1.msra.mxu0 0.0
        %836 = vmatprep.subr.mxu0 0.0
        %837 = vmatpush1.msra.mxu0 0.0
        %838 = vmatprep.subr.mxu0 0.0
        %839 = vmatpush1.msra.mxu0 0.0
        %840 = vmatprep.subr.mxu0 0.0
        %841 = vmatpush1.msra.mxu0 0.0
        %842 = vmatprep.subr.mxu0 0.0
        %843 = vmatpush1.msra.mxu0 0.0
        %844 = vmatprep.subr.mxu0 0.0
        %845 = vmatpush1.msra.mxu0 0.0
        %846 = vmatprep.subr.mxu0 0.0
        %847 = vmatpush1.msra.mxu0 0.0
        %848 = vmatprep.subr.mxu0 0.0
        %849 = vmatpush1.msra.mxu0 0.0
        %850 = vmatprep.subr.mxu0 0.0
        %851 = vmatpush1.msra.mxu0 0.0
        %852 = vmatprep.subr.mxu0 0.0
        %853 = vmatpush1.msra.mxu0 0.0
        %854 = vmatprep.subr.mxu0 0.0
        %855 = vmatpush1.msra.mxu0 0.0
        %856 = vmatprep.subr.mxu0 0.0
        %857 = vmatpush1.msra.mxu0 0.0
        %858 = vmatprep.subr.mxu0 0.0
        %859 = vmatpush1.msra.mxu0 0.0
        %860 = vmatprep.subr.mxu0 0.0
        %861 = vmatpush1.msra.mxu0 0.0
        %862 = vmatprep.subr.mxu0 0.0
        %863 = vmatpush1.msra.mxu0 0.0
        %864 = vmatprep.mubr.f32.mxu0 0.0
        %865 = vmatmul.mubr.f32.gmra.mrb[0].mxu0 %v798
        %v866 = vpop.f32.mrb[0].mxu0
        %v867 = vadd.f32 0.0, %v866
        %v868 = vpop.f32.mrb[0].mxu0
        %869 = vdwg.mxu0
        %v870 = vrot.slane %v867, 4
        %v871 = vadd.f32 %v867, %v870
        %v872 = vrot.slane %v871, 2
        %v873 = vadd.f32 %v871, %v872
        %v874 = vrot.slane %v873, 1
        %v875 = vadd.f32 %v873, %v874
        %v876 = vmul.f32 %v875, %v515
        %v877 = vsub.f32 %v867, %v876
        %v878 = vmul.f32 %v877, %v877
        %v879 = vrot.slane %v878, 4
        %v880 = vadd.f32 %v878, %v879
        %v881 = vrot.slane %v880, 2
        %v882 = vadd.f32 %v880, %v881
        %v883 = vrot.slane %v882, 1
        %v884 = vadd.f32 %v882, %v883
        %v885 = vmul.f32 %v884, %v515
        %v886 = vrsqrt.pop %v885
        %v887 = vmul.f32 %v885, %v886
        %vm888 = vcmp.eq.f32.partialorder %v885, inf
        %v889 = vsel %vm888, %v885, %v887
        %vm890 = vcmp.eq.f32.partialorder %v885, 0.0
        %v891 = vand.u32 %v885, 2147483648
        %v892 = vsel %vm890, %v891, %v889
        %v893 = vadd.f32 %v892, 1e-05
        %v894 = vrcp.pop %v893
        %v895 = vmul.f32 %v429, %v894
        %v897 = vlaneseq
        %v898 = vshrl.u32 %v897, 7
        %v899 = vsub.s32 0, %v898
        %v900 = vrot.slane %v895, %v899
        %v902 = vmul.f32 %v877, %v900
        %v903 = vadd.f32 %v902, %v547
        %s904 = scalar_lea.vmem %s365, 16 [#allocation4]
        %v905 = vld [vmem:[%s904] sm:$0xff]
        %v906 = vadd.f32 %v903, %v905
        %v907 = vxor.u32 %v906, 2147483648
        %v908 = vmul.f32 %v907, 1.442695
        %v909 = vpow.pop %v908
        %v910 = vadd.f32 %v909, 1.0
        %v911 = vrcp.pop %v910
        %v912 = vmul.f32 1.0, %v911
        %v913 = vtanh.pop %v906
        %v914 = vmul.f32 %v912, %v749
        %916 = vrot.lane.b32.xlu0 %v913, 64
        %v917 = vpop.permute.xlu0 %916
        %v919 = vmul.f32 %v912, %v917
        %921 = vrot.lane.b32.xlu0 %v919, 96
        %v922 = vpop.permute.xlu0 %921
        %v924 = vadd.f32 %v914, %v922
        %v925 = vsel %vm435, %v924, 0.0
        %v926 = vrot.slane %v925, 4
        %v927 = vadd.f32 %v925, %v926
        %v928 = vrot.slane %v927, 2
        %v929 = vadd.f32 %v927, %v928
        %v930 = vrot.slane %v929, 1
        %v931 = vadd.f32 %v929, %v930
        %v932 = vmul.f32 %v931, %v515
        %v933 = vsub.f32 %v924, %v932
        %v934 = vmul.f32 %v933, %v933
        %v935 = vsel %vm435, %v934, 0.0
        %v936 = vrot.slane %v935, 4
        %v937 = vadd.f32 %v935, %v936
        %v938 = vrot.slane %v937, 2
        %v939 = vadd.f32 %v937, %v938
        %v940 = vrot.slane %v939, 1
        %v941 = vadd.f32 %v939, %v940
        %v942 = vmul.f32 %v941, %v515
        %v943 = vrsqrt.pop %v942
        %v944 = vmul.f32 %v942, %v943
        %vm945 = vcmp.eq.f32.partialorder %v942, inf
        %v946 = vsel %vm945, %v942, %v944
        %vm947 = vcmp.eq.f32.partialorder %v942, 0.0
        %v948 = vand.u32 %v942, 2147483648
        %v949 = vsel %vm947, %v948, %v946
        %v950 = vadd.f32 %v949, 1e-05
        %v951 = vrcp.pop %v950
        %v952 = vmul.f32 %v431, %v951
        %v954 = vlaneseq
        %v955 = vshrl.u32 %v954, 7
        %v956 = vsub.s32 0, %v955
        %v957 = vrot.slane %v952, %v956
        %v959 = vmul.f32 %v933, %v957
        %v960 = vadd.f32 %v959, %v609
        %v961 = vtanh.pop %v960
        %963 = vrot.lane.b32.xlu0 %v961, 64
        %v964 = vpop.permute.xlu0 %963
        %v966 = vmul.f32 %v912, %v964
        %968 = vrot.lane.b32.xlu0 %v966, 64
        %v969 = vpop.permute.xlu0 %968
        %s971 = scalar_lea.vmem %s409, 16 [#allocation12]
        %972 = vst.msk [vmem:[%s971] sm:$0xff] %vm435, %v969
        %v973 = vsel %vm435, %v969, 0
        %975 = vmatprep.subr.mxu0 0.0
        %976 = vmatpush1.msra.mxu0 %v425
        %977 = vmatprep.subr.mxu0 0.0
        %978 = vmatpush1.msra.mxu0 %v426
        %979 = vmatprep.subr.mxu0 0.0
        %980 = vmatpush1.msra.mxu0 %v427
        %981 = vmatprep.subr.mxu0 0.0
        %982 = vmatpush1.msra.mxu0 %v428
        %983 = vmatprep.subr.mxu0 0.0
        %984 = vmatpush1.msra.mxu0 0.0
        %985 = vmatprep.subr.mxu0 0.0
        %986 = vmatpush1.msra.mxu0 0.0
        %987 = vmatprep.subr.mxu0 0.0
        %988 = vmatpush1.msra.mxu0 0.0
        %989 = vmatprep.subr.mxu0 0.0
        %990 = vmatpush1.msra.mxu0 0.0
        %991 = vmatprep.subr.mxu0 0.0
        %992 = vmatpush1.msra.mxu0 0.0
        %993 = vmatprep.subr.mxu0 0.0
        %994 = vmatpush1.msra.mxu0 0.0
        %995 = vmatprep.subr.mxu0 0.0
        %996 = vmatpush1.msra.mxu0 0.0
        %997 = vmatprep.subr.mxu0 0.0
        %998 = vmatpush1.msra.mxu0 0.0
        %999 = vmatprep.subr.mxu0 0.0
        %1000 = vmatpush1.msra.mxu0 0.0
        %1001 = vmatprep.subr.mxu0 0.0
        %1002 = vmatpush1.msra.mxu0 0.0
        %1003 = vmatprep.subr.mxu0 0.0
        %1004 = vmatpush1.msra.mxu0 0.0
        %1005 = vmatprep.subr.mxu0 0.0
        %1006 = vmatpush1.msra.mxu0 0.0
        %1007 = vmatprep.subr.mxu0 0.0
        %1008 = vmatpush1.msra.mxu0 0.0
        %1009 = vmatprep.subr.mxu0 0.0
        %1010 = vmatpush1.msra.mxu0 0.0
        %1011 = vmatprep.subr.mxu0 0.0
        %1012 = vmatpush1.msra.mxu0 0.0
        %1013 = vmatprep.subr.mxu0 0.0
        %1014 = vmatpush1.msra.mxu0 0.0
        %1015 = vmatprep.subr.mxu0 0.0
        %1016 = vmatpush1.msra.mxu0 0.0
        %1017 = vmatprep.subr.mxu0 0.0
        %1018 = vmatpush1.msra.mxu0 0.0
        %1019 = vmatprep.subr.mxu0 0.0
        %1020 = vmatpush1.msra.mxu0 0.0
        %1021 = vmatprep.subr.mxu0 0.0
        %1022 = vmatpush1.msra.mxu0 0.0
        %1023 = vmatprep.subr.mxu0 0.0
        %1024 = vmatpush1.msra.mxu0 0.0
        %1025 = vmatprep.subr.mxu0 0.0
        %1026 = vmatpush1.msra.mxu0 0.0
        %1027 = vmatprep.subr.mxu0 0.0
        %1028 = vmatpush1.msra.mxu0 0.0
        %1029 = vmatprep.subr.mxu0 0.0
        %1030 = vmatpush1.msra.mxu0 0.0
        %1031 = vmatprep.subr.mxu0 0.0
        %1032 = vmatpush1.msra.mxu0 0.0
        %1033 = vmatprep.subr.mxu0 0.0
        %1034 = vmatpush1.msra.mxu0 0.0
        %1035 = vmatprep.subr.mxu0 0.0
        %1036 = vmatpush1.msra.mxu0 0.0
        %1037 = vmatprep.subr.mxu0 0.0
        %1038 = vmatpush1.msra.mxu0 0.0
        %1039 = vmatprep.mubr.f32.mxu0 0.0
        %1040 = vmatmul.mubr.f32.gmra.mrb[0].mxu0 %v973
        %v1041 = vpop.f32.mrb[0].mxu0
        %v1042 = vadd.f32 0.0, %v1041
        %v1043 = vpop.f32.mrb[0].mxu0
        %1044 = vdwg.mxu0
        %v1045 = vrot.slane %v1042, 4
        %v1046 = vadd.f32 %v1042, %v1045
        %v1047 = vrot.slane %v1046, 2
        %v1048 = vadd.f32 %v1046, %v1047
        %v1049 = vrot.slane %v1048, 1
        %v1050 = vadd.f32 %v1048, %v1049
        %v1051 = vmul.f32 %v1050, %v515
        %v1052 = vsub.f32 %v1042, %v1051
        %v1053 = vmul.f32 %v1052, %v1052
        %v1054 = vrot.slane %v1053, 4
        %v1055 = vadd.f32 %v1053, %v1054
        %v1056 = vrot.slane %v1055, 2
        %v1057 = vadd.f32 %v1055, %v1056
        %v1058 = vrot.slane %v1057, 1
        %v1059 = vadd.f32 %v1057, %v1058
        %v1060 = vmul.f32 %v1059, %v515
        %v1061 = vrsqrt.pop %v1060
        %v1062 = vmul.f32 %v1060, %v1061
        %vm1063 = vcmp.eq.f32.partialorder %v1060, inf
        %v1064 = vsel %vm1063, %v1060, %v1062
        %vm1065 = vcmp.eq.f32.partialorder %v1060, 0.0
        %v1066 = vand.u32 %v1060, 2147483648
        %v1067 = vsel %vm1065, %v1066, %v1064
        %v1068 = vadd.f32 %v1067, 1e-05
        %v1069 = vrcp.pop %v1068
        %v1070 = vmul.f32 %v429, %v1069
        %v1072 = vlaneseq
        %v1073 = vshrl.u32 %v1072, 7
        %v1074 = vsub.s32 0, %v1073
        %v1075 = vrot.slane %v1070, %v1074
        %v1077 = vmul.f32 %v1052, %v1075
        %v1078 = vadd.f32 %v1077, %v547
        %s1079 = scalar_lea.vmem %s365, 24 [#allocation4]
        %v1080 = vld [vmem:[%s1079] sm:$0xff]
        %v1081 = vadd.f32 %v1078, %v1080
        %v1082 = vxor.u32 %v1081, 2147483648
        %v1083 = vmul.f32 %v1082, 1.442695
        %v1084 = vpow.pop %v1083
        %v1085 = vadd.f32 %v1084, 1.0
        %v1086 = vrcp.pop %v1085
        %v1087 = vmul.f32 1.0, %v1086
        %v1088 = vtanh.pop %v1081
        %v1089 = vmul.f32 %v1087, %v924
        %1091 = vrot.lane.b32.xlu0 %v1088, 64
        %v1092 = vpop.permute.xlu0 %1091
        %v1094 = vmul.f32 %v1087, %v1092
        %1096 = vrot.lane.b32.xlu0 %v1094, 96
        %v1097 = vpop.permute.xlu0 %1096
        %v1099 = vadd.f32 %v1089, %v1097
        %v1100 = vsel %vm435, %v1099, 0.0
        %v1101 = vrot.slane %v1100, 4
        %v1102 = vadd.f32 %v1100, %v1101
        %v1103 = vrot.slane %v1102, 2
        %v1104 = vadd.f32 %v1102, %v1103
        %v1105 = vrot.slane %v1104, 1
        %v1106 = vadd.f32 %v1104, %v1105
        %v1107 = vmul.f32 %v1106, %v515
        %v1108 = vsub.f32 %v1099, %v1107
        %v1109 = vmul.f32 %v1108, %v1108
        %v1110 = vsel %vm435, %v1109, 0.0
        %v1111 = vrot.slane %v1110, 4
        %v1112 = vadd.f32 %v1110, %v1111
        %v1113 = vrot.slane %v1112, 2
        %v1114 = vadd.f32 %v1112, %v1113
        %v1115 = vrot.slane %v1114, 1
        %v1116 = vadd.f32 %v1114, %v1115
        %v1117 = vmul.f32 %v1116, %v515
        %v1118 = vrsqrt.pop %v1117
        %v1119 = vmul.f32 %v1117, %v1118
        %vm1120 = vcmp.eq.f32.partialorder %v1117, inf
        %v1121 = vsel %vm1120, %v1117, %v1119
        %vm1122 = vcmp.eq.f32.partialorder %v1117, 0.0
        %v1123 = vand.u32 %v1117, 2147483648
        %v1124 = vsel %vm1122, %v1123, %v1121
        %v1125 = vadd.f32 %v1124, 1e-05
        %v1126 = vrcp.pop %v1125
        %v1127 = vmul.f32 %v431, %v1126
        %v1129 = vlaneseq
        %v1130 = vshrl.u32 %v1129, 7
        %v1131 = vsub.s32 0, %v1130
        %v1132 = vrot.slane %v1127, %v1131
        %v1134 = vmul.f32 %v1108, %v1132
        %v1135 = vadd.f32 %v1134, %v609
        %v1136 = vtanh.pop %v1135
        %1138 = vrot.lane.b32.xlu0 %v1136, 64
        %v1139 = vpop.permute.xlu0 %1138
        %v1141 = vmul.f32 %v1087, %v1139
        %1143 = vrot.lane.b32.xlu0 %v1141, 64
        %v1144 = vpop.permute.xlu0 %1143
        %s1146 = scalar_lea.vmem %s409, 24 [#allocation12]
        %1147 = vst.msk [vmem:[%s1146] sm:$0xff] %vm435, %v1144
        %1148 = vst.msk [vmem:[#allocation2] sm:$0xff] %vm435, %v1144
        %1149 = vst.msk [vmem:[#allocation3] sm:$0xff] %vm435, %v1099
        %p1150 = scmp.eq.s32.totalorder %s31, 1
        // Predicated region
        $region73: #{tpu_custom_call.1} parent=51 // pred_check
          %p1151 = pneg %p1150
        $region74: #{tpu_custom_call.1} parent=51 // pred_check_branch
          %1153 = sbr.rel (%p1151) target = $region76
        $region75: #{tpu_custom_call.1} parent=51 // pred_region
          %1154 = vst.msk [vmem:[#allocation13] sm:$0xff] %vm435, %v1144
          %1155 = vst.msk [vmem:[#allocation15] sm:$0xff] %vm435, %v1099
        $region76: #{tpu_custom_call.1} parent=51 // pred_fallthru
          _
        %s1156 = sand.u32 %s212, 1
        %s1157 = scalar_lea.sflag [#allocation6], %s1156
        %s1158 = sand.u32 %s212, 1
        %s1159 = smul.addr %s1158, 32
        %s1160 = scalar_lea.vmem [#allocation12], %s1159
        // Predicated region
        $region77: #{tpu_custom_call.1} parent=51 // pred_check
          %p1161 = pneg %p222
        $region78: #{tpu_custom_call.1} parent=51 // pred_check_branch
          %1163 = sbr.rel (%p1161) target = $region80
        $region79: #{tpu_custom_call.1} parent=51 // pred_region
          %s1164 = smul.u32 4, %s31
          %s1166 = ssub.s32 512, 512
          %1167 = vsyncadd %s1157, %s1166
          %s1168 = smul.addr %s1164, 128
          %s1169 = scalar_lea.hbm %s8, %s1168
          %s1170 = sshll.u32 %s1160, 4
          %s1171 = int_to_ptr.vmem [resolvable:$true] %s1170
          %1176 = dma.vmem_to_hbm [thread:$0]  %s1171, 512, %s1169, %s1157, 128, 128, 8
        $region80: #{tpu_custom_call.1} parent=51 // pred_fallthru
          _
        // Predicated region
        $region81: #{tpu_custom_call.1} parent=51 // pred_check
          %p1177 = pneg %p243
        $region82: #{tpu_custom_call.1} parent=51 // pred_check_branch
          %1179 = sbr.rel (%p1177) target = $region84
        $region83: #{tpu_custom_call.1} parent=51 // pred_region
          %s1181 = ssub.s32 128, 128
          %1182 = vsyncadd [#allocation14], %s1181
          %s1184 = sshll.u32 [#allocation13], 4
          %s1185 = int_to_ptr.vmem [resolvable:$true] %s1184
          %1187 = dma.vmem_to_hbm [thread:$0]  %s1185, 128, %s9, [#allocation14]
        $region84: #{tpu_custom_call.1} parent=51 // pred_fallthru
          _
        // Predicated region
        $region85: #{tpu_custom_call.1} parent=51 // pred_check
          %p1188 = pneg %p264
        $region86: #{tpu_custom_call.1} parent=51 // pred_check_branch
          %1190 = sbr.rel (%p1188) target = $region88
        $region87: #{tpu_custom_call.1} parent=51 // pred_region
          %s1192 = ssub.s32 128, 128
          %1193 = vsyncadd [#allocation14], %s1192
          %s1195 = sshll.u32 [#allocation15], 4
          %s1196 = int_to_ptr.vmem [resolvable:$true] %s1195
          %1198 = dma.vmem_to_hbm [thread:$0]  %s1196, 128, %s10, [#allocation14]
        $region88: #{tpu_custom_call.1} parent=51 // pred_fallthru
          _
        // Predicated region
        $region89: #{tpu_custom_call.1} parent=51 // pred_check
          %p1199 = pneg %p243
        $region90: #{tpu_custom_call.1} parent=51 // pred_check_branch
          %1201 = sbr.rel (%p1199) target = $region92
        $region91: #{tpu_custom_call.1} parent=51 // pred_region
          %1202 = dma.done [#allocation14], 128
        $region92: #{tpu_custom_call.1} parent=51 // pred_fallthru
          _
        // Predicated region
        $region93: #{tpu_custom_call.1} parent=51 // pred_check
          %p1203 = pneg %p264
        $region94: #{tpu_custom_call.1} parent=51 // pred_check_branch
          %1205 = sbr.rel (%p1203) target = $region96
        $region95: #{tpu_custom_call.1} parent=51 // pred_region
          %1206 = dma.done [#allocation14], 128
        $region96: #{tpu_custom_call.1} parent=51 // pred_fallthru
          _
      $region52: #{tpu_custom_call.1} parent=5 // pred_fallthru
        _
      %p1207 = scmp.le.s32.totalorder 2, %s26
      // Predicated region
      $region97: #{tpu_custom_call.1} parent=5 // pred_check
        %p1208 = pneg %p1207
      $region98: #{tpu_custom_call.1} parent=5 // pred_check_branch
        %1210 = sbr.rel (%p1208) target = $region100
      $region99: #{tpu_custom_call.1} parent=5 // pred_region
        %s1211 = ssub.s32 %s26, 2
        // Predicated region
        $region101: #{tpu_custom_call.1} parent=99 // pred_check
          %p1212 = pneg %p228
        $region102: #{tpu_custom_call.1} parent=99 // pred_check_branch
          %1214 = sbr.rel (%p1212) target = $region104
        $region103: #{tpu_custom_call.1} parent=99 // pred_region
          %s1215 = sand.u32 %s213, 1
          %s1216 = scalar_lea.sflag [#allocation6], %s1215
          %s1217 = sand.u32 %s213, 1
          %s1218 = smul.addr %s1217, 32
          %s1219 = scalar_lea.vmem [#allocation12], %s1218
          %1220 = dma.done %s1216, 512
        $region104: #{tpu_custom_call.1} parent=99 // pred_fallthru
          _
      $region100: #{tpu_custom_call.1} parent=5 // pred_fallthru
        _
    $region6: #{tpu_custom_call.1} parent=1 // loop_footer
      %s30 = sadd.s32 1, %s26
    $region7: #{tpu_custom_call.1} parent=1 // loop_footer_branch
      %25 = sbr.rel target = $region3
    $region8: #{tpu_custom_call.1} parent=1 // loop_exit
      _
    %1221 = vsyncpa [#allocation5], 1
    %s1222 = scalar_lea.sflag [#allocation5], 1
    %1223 = vsyncpa %s1222, 1
    %1224 = vsyncpa [#allocation8], 1
    %1225 = vsyncpa [#allocation11], 1
    %1226 = vsyncpa [#allocation6], 1
    %s1227 = scalar_lea.sflag [#allocation6], 1
    %1228 = vsyncpa %s1227, 1
    %1229 = vsyncpa [#allocation14], 1

</llo_original>
